<compile_context>
chip_gen: v7x
topology: tpu7x:2x2x1
jax: 0.10.0
libtpu: 0.0.40
codegen_flags: <defaults>
</compile_context>

<pallas_src>
import jax
import jax.numpy as jnp
from jax.experimental import pallas as pl
from jax.experimental.pallas import tpu as pltpu

# ----------------------------- config (small, synthetic) -----------------------------
BATCH = 2
SEQ = 8
HIDDEN = 32          # "embedding_size" of the synthetic backbone
FFN = 64
VOCAB = 100
INTENT_NUM = 19
SLOT_NUM = 3
LN_EPS = 1e-5
LANE = 128                         # lane-dense output width per head
ATT_SCALE = 1.0 / (HIDDEN ** 0.5)

# packed encoder-weight slab: every matmul-RHS segment starts on a 128-lane boundary
CO_QKV = 0            # [Wq | Wk | Wv]  cols 0:96
CO_WO = 128           # Wo              cols 128:160
CO_W1 = 256           # W1              cols 256:320
CO_WP = 384           # Wpool           cols 384:416
WENC_W = 512


# ----------------------------- fused Pallas kernel -----------------------------
def _layernorm(x, g, b):
    mu = jnp.mean(x, axis=-1, keepdims=True)
    var = jnp.mean((x - mu) ** 2, axis=-1, keepdims=True)
    return (x - mu) * jax.lax.rsqrt(var + LN_EPS) * g + b


def fused_kernel(ids_ref, mask_ref, tok_emb_ref, pos_emb_ref, wenc_ref, w2_ref,
                 whead_ref, vec_ref, intent_ref, slot_ref, x_buf):
    """One sequence per grid step: embedding gather + encoder layer + pooler + both heads.

    ids_ref:     (B, S)         int32, SMEM (scalar prefetch)
    mask_ref:    (1, 1, S)      int32 key-padding mask for this sequence
    tok_emb_ref: (VOCAB, 1, H)  token embedding table (leading axis indexed dynamically)
    pos_emb_ref: (S, H)         position embeddings
    wenc_ref:    (H, WENC_W)    packed [QKV@0 | Wo@128 | W1@256 | Wpool@384]
    w2_ref:      (F, H)         FFN down projection
    whead_ref:   (H, 256)       zero-padded [Wintent 0:128 | Wslot 128:256]
    vec_ref:     (16, 256)      packed bias / LayerNorm rows (see make_params)
    intent_ref:  (1, 1, 128)    lane-dense intent logits (CLS row only)
    slot_ref:    (1, S, 128)    lane-dense slot logits (all rows)
    x_buf:       (S, H)         VMEM scratch holding the embedded sequence
    """
    H, F, S = HIDDEN, FFN, SEQ
    b = pl.program_id(0)

    # --- fused embedding lookup: token gather from the VMEM table + position add ---
    for s in range(S):                                   # static unroll, S=8
        tok = ids_ref[b, s]                              # scalar from SMEM
        x_buf[pl.ds(s, 1), :] = tok_emb_ref[tok] + pos_emb_ref[pl.ds(s, 1), :]
    x = x_buf[...]                                       # (S, H) f32

    # --- fused QKV projection: one (S,H) x (H,3H) MXU push (RHS starts at lane 0) ---
    qkv = jnp.dot(x, wenc_ref[:, CO_QKV:CO_QKV + 3 * H],
                  preferred_element_type=jnp.float32) + vec_ref[0:1, 0:3 * H]
    q = qkv[:, 0:H]
    k = qkv[:, H:2 * H]
    v = qkv[:, 2 * H:3 * H]

    # --- attention with in-kernel key-padding bias (pure VPU work, hides under MXU slack) ---
    bias = jnp.where(mask_ref[0] > 0, 0.0, -1e9).astype(jnp.float32)   # (1, S)
    scores = jnp.dot(q, k.T, preferred_element_type=jnp.float32) * ATT_SCALE + bias
    m = jnp.max(scores, axis=-1, keepdims=True)
    p = jnp.exp(scores - m)
    attn = p * pl.reciprocal(jnp.sum(p, axis=-1, keepdims=True), approx=True)

    ctx = jnp.dot(attn, v, preferred_element_type=jnp.float32)          # (S, H)
    attn_out = jnp.dot(ctx, wenc_ref[:, CO_WO:CO_WO + H],
                       preferred_element_type=jnp.float32) + vec_ref[1:2, 0:H]
    h1 = _layernorm(x + attn_out, vec_ref[2:3, 0:H], vec_ref[3:4, 0:H])

    # --- FFN ---
    ff = jnp.dot(h1, wenc_ref[:, CO_W1:CO_W1 + F],
                 preferred_element_type=jnp.float32) + vec_ref[4:5, 0:F]
    ff = jax.nn.gelu(ff, approximate=True)
    ff = jnp.dot(ff, w2_ref[...], preferred_element_type=jnp.float32) + vec_ref[5:6, 0:H]
    h2 = _layernorm(h1 + ff, vec_ref[6:7, 0:H], vec_ref[7:8, 0:H])      # last_hidden_state

    # --- pooler + intent head on the CLS row only ---
    cls = h2[0:1, :]
    pooled = jnp.tanh(jnp.dot(cls, wenc_ref[:, CO_WP:CO_WP + H],
                              preferred_element_type=jnp.float32) + vec_ref[8:9, 0:H])
    intent_ref[0] = (jnp.dot(pooled, whead_ref[:, 0:LANE],
                             preferred_element_type=jnp.float32) + vec_ref[9:10, 0:LANE])

    # --- slot head on all rows: (S, 128) lane-dense unmasked store ---
    slot_ref[0] = (jnp.dot(h2, whead_ref[:, LANE:2 * LANE],
                           preferred_element_type=jnp.float32) + vec_ref[10:11, 0:LANE])


# ----------------------------- wrapper -----------------------------
def _cost_estimate(B, S):
    H, F = HIDDEN, FFN
    per_seq = (2 * S * H * 3 * H        # QKV
               + 2 * S * S * H          # scores
               + 2 * S * S * H          # ctx
               + 2 * S * H * H          # Wo
               + 2 * S * H * F          # W1
               + 2 * S * F * H          # W2
               + 2 * H * H              # pooler (CLS row)
               + 2 * H * LANE           # intent head
               + 2 * S * H * LANE)      # slot head
    flops = B * per_seq
    transcendentals = B * (S * S + S * F + H + S)        # exp + gelu + tanh + reciprocal
    bytes_accessed = 4 * (B * S                           # ids
                          + B * S                         # mask
                          + VOCAB * H + S * H             # embedding tables
                          + H * WENC_W + F * H + H * 2 * LANE + 16 * 2 * LANE
                          + B * LANE + B * S * LANE)      # outputs
    return pl.CostEstimate(flops=flops, transcendentals=transcendentals,
                           bytes_accessed=bytes_accessed)


@jax.jit
def intent_slot_forward(input_ids, attention_mask, params):
    B, S = input_ids.shape
    H = HIDDEN

    grid_spec = pltpu.PrefetchScalarGridSpec(
        num_scalar_prefetch=1,                # input_ids -> SMEM, used for the in-kernel gather
        grid=(B,),
        in_specs=[
            pl.BlockSpec((1, 1, S), lambda b, ids: (b, 0, 0)),        # attention_mask (B,1,S)
            pl.BlockSpec((VOCAB, 1, H), lambda b, ids: (0, 0, 0)),    # token embedding table
            pl.BlockSpec((S, H), lambda b, ids: (0, 0)),              # position embeddings
            pl.BlockSpec((H, WENC_W), lambda b, ids: (0, 0)),         # packed encoder weights
            pl.BlockSpec((FFN, H), lambda b, ids: (0, 0)),            # FFN down projection
            pl.BlockSpec((H, 2 * LANE), lambda b, ids: (0, 0)),       # packed head weights
            pl.BlockSpec((16, 2 * LANE), lambda b, ids: (0, 0)),      # packed bias/LN vectors
        ],
        out_specs=[
            pl.BlockSpec((1, 1, LANE), lambda b, ids: (b, 0, 0)),     # intent logits (padded)
            pl.BlockSpec((1, S, LANE), lambda b, ids: (b, 0, 0)),     # slot logits (padded)
        ],
        scratch_shapes=[pltpu.VMEM((S, H), jnp.float32)],
    )

    intent_pad, slot_pad = pl.pallas_call(
        fused_kernel,
        out_shape=(jax.ShapeDtypeStruct((B, 1, LANE), jnp.float32),
                   jax.ShapeDtypeStruct((B, S, LANE), jnp.float32)),
        grid_spec=grid_spec,
        compiler_params=pltpu.CompilerParams(dimension_semantics=("parallel",)),
        cost_estimate=_cost_estimate(B, S),
    )(input_ids,
      attention_mask[:, None, :],            # raw int32 key-padding mask; bias built in-kernel
      params["tok_emb3"], params["pos_emb"], params["w_enc"], params["w2"],
      params["w_heads"], params["vecs"])

    intent = intent_pad[:, 0, 0:INTENT_NUM]              # (B, INTENT_NUM)  from CLS rows
    slot = slot_pad[:, 1:, 0:SLOT_NUM]                   # (B, S-1, SLOT_NUM)
    return intent, slot


# ----------------------------- deterministic params -----------------------------
def make_params(key):
    keys = jax.random.split(key, 14)
    n = lambda k, shape, s=0.05: (s * jax.random.normal(k, shape)).astype(jnp.float32)
    H, F = HIDDEN, FFN
    p = {
        "tok_emb": n(keys[0], (VOCAB, H)),
        "pos_emb": n(keys[1], (SEQ, H)),
        "wq": n(keys[2], (H, H)), "bq": jnp.zeros((H,), jnp.float32),
        "wk": n(keys[3], (H, H)), "bk": jnp.zeros((H,), jnp.float32),
        "wv": n(keys[4], (H, H)), "bv": jnp.zeros((H,), jnp.float32),
        "wo": n(keys[5], (H, H)), "bo": jnp.zeros((H,), jnp.float32),
        "g1": jnp.ones((H,), jnp.float32), "be1": jnp.zeros((H,), jnp.float32),
        "w1": n(keys[6], (H, F)), "c1": jnp.zeros((F,), jnp.float32),
        "w2": n(keys[7], (F, H)), "c2": jnp.zeros((H,), jnp.float32),
        "g2": jnp.ones((H,), jnp.float32), "be2": jnp.zeros((H,), jnp.float32),
        "wp": n(keys[8], (H, H)), "bp": n(keys[9], (H,)),
        # nn.Linear stores (out, in); kernel/reference consume the transpose (in, out)
        "wi_t": n(keys[10], (INTENT_NUM, H)).T, "bi": n(keys[11], (INTENT_NUM,)),
        "ws_t": n(keys[12], (SLOT_NUM, H)).T, "bs": n(keys[13], (SLOT_NUM,)),
    }

    # 3-D token table so the kernel can index the (untiled) leading axis dynamically
    p["tok_emb3"] = p["tok_emb"].reshape(VOCAB, 1, H)

    # packed encoder slab: each matmul-RHS segment starts on a 128-lane boundary (zero gaps)
    w_enc = jnp.zeros((H, WENC_W), jnp.float32)
    w_enc = w_enc.at[:, CO_QKV:CO_QKV + 3 * H].set(
        jnp.concatenate([p["wq"], p["wk"], p["wv"]], axis=1))
    w_enc = w_enc.at[:, CO_WO:CO_WO + H].set(p["wo"])
    w_enc = w_enc.at[:, CO_W1:CO_W1 + F].set(p["w1"])
    w_enc = w_enc.at[:, CO_WP:CO_WP + H].set(p["wp"])

    # lane-dense, zero-padded head weights: intent in cols 0:128, slot in cols 128:256
    w_heads = jnp.zeros((H, 2 * LANE), jnp.float32)
    w_heads = w_heads.at[:, 0:INTENT_NUM].set(p["wi_t"])
    w_heads = w_heads.at[:, LANE:LANE + SLOT_NUM].set(p["ws_t"])

    # packed bias / LayerNorm vectors; every row slice the kernel reads starts at col 0 (aligned)
    vecs = jnp.zeros((16, 2 * LANE), jnp.float32)
    vecs = vecs.at[0, 0:3 * H].set(jnp.concatenate([p["bq"], p["bk"], p["bv"]]))
    vecs = vecs.at[1, 0:H].set(p["bo"])
    vecs = vecs.at[2, 0:H].set(p["g1"])
    vecs = vecs.at[3, 0:H].set(p["be1"])
    vecs = vecs.at[4, 0:F].set(p["c1"])
    vecs = vecs.at[5, 0:H].set(p["c2"])
    vecs = vecs.at[6, 0:H].set(p["g2"])
    vecs = vecs.at[7, 0:H].set(p["be2"])
    vecs = vecs.at[8, 0:H].set(p["bp"])
    vecs = vecs.at[9, 0:INTENT_NUM].set(p["bi"])
    vecs = vecs.at[10, 0:SLOT_NUM].set(p["bs"])

    p.update({"w_enc": w_enc, "w_heads": w_heads, "vecs": vecs})
    return p


# ----------------------------- pure-JAX reference -----------------------------
def reference_forward(input_ids, attention_mask, p):
    x = p["tok_emb"][input_ids] + p["pos_emb"][None]
    mask = attention_mask.astype(jnp.float32)

    def ln(v, g, b):
        mu = jnp.mean(v, -1, keepdims=True)
        var = jnp.mean((v - mu) ** 2, -1, keepdims=True)
        return (v - mu) / jnp.sqrt(var + LN_EPS) * g + b

    q = x @ p["wq"] + p["bq"]; k = x @ p["wk"] + p["bk"]; v = x @ p["wv"] + p["bv"]
    s = jnp.einsum("bqh,bkh->bqk", q, k) * ATT_SCALE
    s = s + (mask[:, None, :] - 1.0) * 1e9
    a = jax.nn.softmax(s, axis=-1)
    ctx = jnp.einsum("bqk,bkh->bqh", a, v)
    h1 = ln(x + (ctx @ p["wo"] + p["bo"]), p["g1"], p["be1"])
    ff = jax.nn.gelu(h1 @ p["w1"] + p["c1"], approximate=True) @ p["w2"] + p["c2"]
    h2 = ln(h1 + ff, p["g2"], p["be2"])

    pooled = jnp.tanh(h2[:, 0, :] @ p["wp"] + p["bp"])
    intent = pooled @ p["wi_t"] + p["bi"]
    slot = h2[:, 1:, :] @ p["ws_t"] + p["bs"]
    return intent, slot


# ----------------------------- main -----------------------------
if __name__ == "__main__":
    key = jax.random.PRNGKey(0)
    k_ids, k_par = jax.random.split(key)

    input_ids = jax.random.randint(k_ids, (BATCH, SEQ), 0, VOCAB, dtype=jnp.int32)
    attention_mask = jnp.array(
        [[1, 1, 1, 1, 1, 1, 1, 1],
         [1, 1, 1, 1, 1, 0, 0, 0]], dtype=jnp.int32)

    params = make_params(k_par)

    intent_out, slot_out = intent_slot_forward(input_ids, attention_mask, params)
    intent_out = jax.block_until_ready(intent_out)
    slot_out = jax.block_until_ready(slot_out)

    intent_ref, slot_ref = reference_forward(input_ids, attention_mask, params)
    assert intent_out.shape == (BATCH, INTENT_NUM)
    assert slot_out.shape == (BATCH, SEQ - 1, SLOT_NUM)
    # tolerance allows the EUP approximate-reciprocal softmax denominator
    assert jnp.allclose(intent_out, intent_ref, atol=1e-3, rtol=1e-3)
    assert jnp.allclose(slot_out, slot_ref, atol=1e-3, rtol=1e-3)

    print("KERNEL_OK")
</pallas_src>

<mosaic_0001>
module attributes {stable_mosaic.version = 11 : i64} {
  func.func @fused_kernel(%arg0: i32, %arg1: memref<2x8xi32, #tpu.memory_space<smem>>, %arg2: memref<1x1x8xi32, #tpu.memory_space<vmem>>, %arg3: memref<100x1x32xf32, #tpu.memory_space<vmem>>, %arg4: memref<8x32xf32, #tpu.memory_space<vmem>>, %arg5: memref<32x512xf32, #tpu.memory_space<vmem>>, %arg6: memref<64x32xf32, #tpu.memory_space<vmem>>, %arg7: memref<32x256xf32, #tpu.memory_space<vmem>>, %arg8: memref<16x256xf32, #tpu.memory_space<vmem>>, %arg9: memref<1x1x128xf32, #tpu.memory_space<vmem>>, %arg10: memref<1x8x128xf32, #tpu.memory_space<vmem>>, %arg11: memref<8x32xf32, #tpu.memory_space<vmem>>) attributes {dimension_semantics = [#tpu.dimension_semantics<parallel>], iteration_bounds = array<i64: 2>, scalar_prefetch = 1 : i64, scratch_operands = 1 : i64, tpu.core_type = #tpu.core_type<tc>, window_params = [{transform_indices = @transform_0, window_bounds = array<i64: 1, 1, 8>}, {pipeline_mode = #tpu.pipeline_mode<synchronous>, transform_indices = @transform_1, window_bounds = array<i64: 100, 1, 32>}, {pipeline_mode = #tpu.pipeline_mode<synchronous>, transform_indices = @transform_2, window_bounds = array<i64: 8, 32>}, {pipeline_mode = #tpu.pipeline_mode<synchronous>, transform_indices = @transform_3, window_bounds = array<i64: 32, 512>}, {pipeline_mode = #tpu.pipeline_mode<synchronous>, transform_indices = @transform_4, window_bounds = array<i64: 64, 32>}, {pipeline_mode = #tpu.pipeline_mode<synchronous>, transform_indices = @transform_5, window_bounds = array<i64: 32, 256>}, {pipeline_mode = #tpu.pipeline_mode<synchronous>, transform_indices = @transform_6, window_bounds = array<i64: 16, 256>}, {transform_indices = @transform_7, window_bounds = array<i64: 1, 1, 128>}, {transform_indices = @transform_8, window_bounds = array<i64: 1, 8, 128>}]} {
    %0 = arith.index_cast %arg0 : i32 to index
    %c0 = arith.constant 0 : index
    %1 = memref.load %arg1[%0, %c0] : memref<2x8xi32, #tpu.memory_space<smem>>
    %2 = arith.index_cast %1 : i32 to index
    %c0_0 = arith.constant 0 : index
    %c0_1 = arith.constant 0 : index
    %3 = vector.load %arg3[%2, %c0_0, %c0_1] : memref<100x1x32xf32, #tpu.memory_space<vmem>>, vector<1x1x32xf32>
    %4 = vector.shape_cast %3 : vector<1x1x32xf32> to vector<1x32xf32>
    %c0_2 = arith.constant 0 : index
    %c0_3 = arith.constant 0 : index
    %5 = vector.load %arg4[%c0_2, %c0_3] : memref<8x32xf32, #tpu.memory_space<vmem>>, vector<1x32xf32>
    %6 = arith.addf %4, %5 : vector<1x32xf32>
    %c0_4 = arith.constant 0 : index
    %c0_5 = arith.constant 0 : index
    %7 = vector.load %arg11[%c0_4, %c0_5] : memref<8x32xf32, #tpu.memory_space<vmem>>, vector<1x32xf32>
    tpu.vector_store %arg11[%c0_4, %c0_5], %6 {strides = array<i32>} : memref<8x32xf32, #tpu.memory_space<vmem>>, vector<1x32xf32>,
    %8 = arith.index_cast %arg0 : i32 to index
    %c1 = arith.constant 1 : index
    %9 = memref.load %arg1[%8, %c1] : memref<2x8xi32, #tpu.memory_space<smem>>
    %10 = arith.index_cast %9 : i32 to index
    %c0_6 = arith.constant 0 : index
    %c0_7 = arith.constant 0 : index
    %11 = vector.load %arg3[%10, %c0_6, %c0_7] : memref<100x1x32xf32, #tpu.memory_space<vmem>>, vector<1x1x32xf32>
    %12 = vector.shape_cast %11 : vector<1x1x32xf32> to vector<1x32xf32>
    %c1_8 = arith.constant 1 : index
    %c0_9 = arith.constant 0 : index
    %13 = vector.load %arg4[%c1_8, %c0_9] : memref<8x32xf32, #tpu.memory_space<vmem>>, vector<1x32xf32>
    %14 = arith.addf %12, %13 : vector<1x32xf32>
    %c1_10 = arith.constant 1 : index
    %c0_11 = arith.constant 0 : index
    %15 = vector.load %arg11[%c1_10, %c0_11] : memref<8x32xf32, #tpu.memory_space<vmem>>, vector<1x32xf32>
    tpu.vector_store %arg11[%c1_10, %c0_11], %14 {strides = array<i32>} : memref<8x32xf32, #tpu.memory_space<vmem>>, vector<1x32xf32>,
    %16 = arith.index_cast %arg0 : i32 to index
    %c2 = arith.constant 2 : index
    %17 = memref.load %arg1[%16, %c2] : memref<2x8xi32, #tpu.memory_space<smem>>
    %18 = arith.index_cast %17 : i32 to index
    %c0_12 = arith.constant 0 : index
    %c0_13 = arith.constant 0 : index
    %19 = vector.load %arg3[%18, %c0_12, %c0_13] : memref<100x1x32xf32, #tpu.memory_space<vmem>>, vector<1x1x32xf32>
    %20 = vector.shape_cast %19 : vector<1x1x32xf32> to vector<1x32xf32>
    %c2_14 = arith.constant 2 : index
    %c0_15 = arith.constant 0 : index
    %21 = vector.load %arg4[%c2_14, %c0_15] : memref<8x32xf32, #tpu.memory_space<vmem>>, vector<1x32xf32>
    %22 = arith.addf %20, %21 : vector<1x32xf32>
    %c2_16 = arith.constant 2 : index
    %c0_17 = arith.constant 0 : index
    %23 = vector.load %arg11[%c2_16, %c0_17] : memref<8x32xf32, #tpu.memory_space<vmem>>, vector<1x32xf32>
    tpu.vector_store %arg11[%c2_16, %c0_17], %22 {strides = array<i32>} : memref<8x32xf32, #tpu.memory_space<vmem>>, vector<1x32xf32>,
    %24 = arith.index_cast %arg0 : i32 to index
    %c3 = arith.constant 3 : index
    %25 = memref.load %arg1[%24, %c3] : memref<2x8xi32, #tpu.memory_space<smem>>
    %26 = arith.index_cast %25 : i32 to index
    %c0_18 = arith.constant 0 : index
    %c0_19 = arith.constant 0 : index
    %27 = vector.load %arg3[%26, %c0_18, %c0_19] : memref<100x1x32xf32, #tpu.memory_space<vmem>>, vector<1x1x32xf32>
    %28 = vector.shape_cast %27 : vector<1x1x32xf32> to vector<1x32xf32>
    %c3_20 = arith.constant 3 : index
    %c0_21 = arith.constant 0 : index
    %29 = vector.load %arg4[%c3_20, %c0_21] : memref<8x32xf32, #tpu.memory_space<vmem>>, vector<1x32xf32>
    %30 = arith.addf %28, %29 : vector<1x32xf32>
    %c3_22 = arith.constant 3 : index
    %c0_23 = arith.constant 0 : index
    %31 = vector.load %arg11[%c3_22, %c0_23] : memref<8x32xf32, #tpu.memory_space<vmem>>, vector<1x32xf32>
    tpu.vector_store %arg11[%c3_22, %c0_23], %30 {strides = array<i32>} : memref<8x32xf32, #tpu.memory_space<vmem>>, vector<1x32xf32>,
    %32 = arith.index_cast %arg0 : i32 to index
    %c4 = arith.constant 4 : index
    %33 = memref.load %arg1[%32, %c4] : memref<2x8xi32, #tpu.memory_space<smem>>
    %34 = arith.index_cast %33 : i32 to index
    %c0_24 = arith.constant 0 : index
    %c0_25 = arith.constant 0 : index
    %35 = vector.load %arg3[%34, %c0_24, %c0_25] : memref<100x1x32xf32, #tpu.memory_space<vmem>>, vector<1x1x32xf32>
    %36 = vector.shape_cast %35 : vector<1x1x32xf32> to vector<1x32xf32>
    %c4_26 = arith.constant 4 : index
    %c0_27 = arith.constant 0 : index
    %37 = vector.load %arg4[%c4_26, %c0_27] : memref<8x32xf32, #tpu.memory_space<vmem>>, vector<1x32xf32>
    %38 = arith.addf %36, %37 : vector<1x32xf32>
    %c4_28 = arith.constant 4 : index
    %c0_29 = arith.constant 0 : index
    %39 = vector.load %arg11[%c4_28, %c0_29] : memref<8x32xf32, #tpu.memory_space<vmem>>, vector<1x32xf32>
    tpu.vector_store %arg11[%c4_28, %c0_29], %38 {strides = array<i32>} : memref<8x32xf32, #tpu.memory_space<vmem>>, vector<1x32xf32>,
    %40 = arith.index_cast %arg0 : i32 to index
    %c5 = arith.constant 5 : index
    %41 = memref.load %arg1[%40, %c5] : memref<2x8xi32, #tpu.memory_space<smem>>
    %42 = arith.index_cast %41 : i32 to index
    %c0_30 = arith.constant 0 : index
    %c0_31 = arith.constant 0 : index
    %43 = vector.load %arg3[%42, %c0_30, %c0_31] : memref<100x1x32xf32, #tpu.memory_space<vmem>>, vector<1x1x32xf32>
    %44 = vector.shape_cast %43 : vector<1x1x32xf32> to vector<1x32xf32>
    %c5_32 = arith.constant 5 : index
    %c0_33 = arith.constant 0 : index
    %45 = vector.load %arg4[%c5_32, %c0_33] : memref<8x32xf32, #tpu.memory_space<vmem>>, vector<1x32xf32>
    %46 = arith.addf %44, %45 : vector<1x32xf32>
    %c5_34 = arith.constant 5 : index
    %c0_35 = arith.constant 0 : index
    %47 = vector.load %arg11[%c5_34, %c0_35] : memref<8x32xf32, #tpu.memory_space<vmem>>, vector<1x32xf32>
    tpu.vector_store %arg11[%c5_34, %c0_35], %46 {strides = array<i32>} : memref<8x32xf32, #tpu.memory_space<vmem>>, vector<1x32xf32>,
    %48 = arith.index_cast %arg0 : i32 to index
    %c6 = arith.constant 6 : index
    %49 = memref.load %arg1[%48, %c6] : memref<2x8xi32, #tpu.memory_space<smem>>
    %50 = arith.index_cast %49 : i32 to index
    %c0_36 = arith.constant 0 : index
    %c0_37 = arith.constant 0 : index
    %51 = vector.load %arg3[%50, %c0_36, %c0_37] : memref<100x1x32xf32, #tpu.memory_space<vmem>>, vector<1x1x32xf32>
    %52 = vector.shape_cast %51 : vector<1x1x32xf32> to vector<1x32xf32>
    %c6_38 = arith.constant 6 : index
    %c0_39 = arith.constant 0 : index
    %53 = vector.load %arg4[%c6_38, %c0_39] : memref<8x32xf32, #tpu.memory_space<vmem>>, vector<1x32xf32>
    %54 = arith.addf %52, %53 : vector<1x32xf32>
    %c6_40 = arith.constant 6 : index
    %c0_41 = arith.constant 0 : index
    %55 = vector.load %arg11[%c6_40, %c0_41] : memref<8x32xf32, #tpu.memory_space<vmem>>, vector<1x32xf32>
    tpu.vector_store %arg11[%c6_40, %c0_41], %54 {strides = array<i32>} : memref<8x32xf32, #tpu.memory_space<vmem>>, vector<1x32xf32>,
    %56 = arith.index_cast %arg0 : i32 to index
    %c7 = arith.constant 7 : index
    %57 = memref.load %arg1[%56, %c7] : memref<2x8xi32, #tpu.memory_space<smem>>
    %58 = arith.index_cast %57 : i32 to index
    %c0_42 = arith.constant 0 : index
    %c0_43 = arith.constant 0 : index
    %59 = vector.load %arg3[%58, %c0_42, %c0_43] : memref<100x1x32xf32, #tpu.memory_space<vmem>>, vector<1x1x32xf32>
    %60 = vector.shape_cast %59 : vector<1x1x32xf32> to vector<1x32xf32>
    %c7_44 = arith.constant 7 : index
    %c0_45 = arith.constant 0 : index
    %61 = vector.load %arg4[%c7_44, %c0_45] : memref<8x32xf32, #tpu.memory_space<vmem>>, vector<1x32xf32>
    %62 = arith.addf %60, %61 : vector<1x32xf32>
    %c7_46 = arith.constant 7 : index
    %c0_47 = arith.constant 0 : index
    %63 = vector.load %arg11[%c7_46, %c0_47] : memref<8x32xf32, #tpu.memory_space<vmem>>, vector<1x32xf32>
    tpu.vector_store %arg11[%c7_46, %c0_47], %62 {strides = array<i32>} : memref<8x32xf32, #tpu.memory_space<vmem>>, vector<1x32xf32>,
    %c0_48 = arith.constant 0 : index
    %c0_49 = arith.constant 0 : index
    %64 = vector.load %arg11[%c0_48, %c0_49] : memref<8x32xf32, #tpu.memory_space<vmem>>, vector<8x32xf32>
    %c0_50 = arith.constant 0 : index
    %c0_51 = arith.constant 0 : index
    %65 = vector.load %arg5[%c0_50, %c0_51] : memref<32x512xf32, #tpu.memory_space<vmem>>, vector<32x96xf32>
    %cst = arith.constant dense<0.000000e+00> : vector<8x96xf32>
    %66 = tpu.matmul %64, %65, %cst {dimension_numbers = #tpu.dot_dimension_numbers<[1], [0], [0], [1], [0, 0, 1, 1], [], []>} : vector<8x32xf32>, vector<32x96xf32>, vector<8x96xf32> -> vector<8x96xf32>
    %c0_52 = arith.constant 0 : index
    %c0_53 = arith.constant 0 : index
    %67 = vector.load %arg8[%c0_52, %c0_53] : memref<16x256xf32, #tpu.memory_space<vmem>>, vector<1x96xf32>
    %68 = vector.broadcast %67 : vector<1x96xf32> to vector<8x96xf32>
    %69 = arith.addf %66, %68 : vector<8x96xf32>
    %70 = vector.extract_strided_slice %69 {offsets = [0, 0], sizes = [8, 32], strides = [1, 1]} : vector<8x96xf32> to vector<8x32xf32>
    %71 = vector.extract_strided_slice %69 {offsets = [0, 32], sizes = [8, 32], strides = [1, 1]} : vector<8x96xf32> to vector<8x32xf32>
    %72 = vector.extract_strided_slice %69 {offsets = [0, 64], sizes = [8, 32], strides = [1, 1]} : vector<8x96xf32> to vector<8x32xf32>
    %c0_54 = arith.constant 0 : index
    %c0_55 = arith.constant 0 : index
    %c0_56 = arith.constant 0 : index
    %73 = vector.load %arg2[%c0_54, %c0_55, %c0_56] : memref<1x1x8xi32, #tpu.memory_space<vmem>>, vector<1x1x8xi32>
    %74 = vector.shape_cast %73 : vector<1x1x8xi32> to vector<1x8xi32>
    %c0_i32 = arith.constant 0 : i32
    %75 = vector.broadcast %c0_i32 : i32 to vector<1x8xi32>
    %76 = arith.cmpi sgt, %74, %75 : vector<1x8xi32>
    %cst_57 = arith.constant 0.000000e+00 : f32
    %cst_58 = arith.constant -1.000000e+09 : f32
    %77 = vector.broadcast %cst_57 : f32 to vector<1x8xf32>
    %78 = vector.broadcast %cst_58 : f32 to vector<1x8xf32>
    %79 = arith.select %76, %77, %78 : vector<1x8xi1>, vector<1x8xf32>
    %80 = tpu.transpose %71, [1, 0] : vector<8x32xf32> -> vector<32x8xf32>
    %cst_59 = arith.constant dense<0.000000e+00> : vector<8x8xf32>
    %81 = tpu.matmul %70, %80, %cst_59 {dimension_numbers = #tpu.dot_dimension_numbers<[1], [0], [0], [1], [0, 0, 1, 1], [], []>} : vector<8x32xf32>, vector<32x8xf32>, vector<8x8xf32> -> vector<8x8xf32>
    %cst_60 = arith.constant 0.176776692 : f32
    %82 = vector.broadcast %cst_60 : f32 to vector<8x8xf32>
    %83 = arith.mulf %81, %82 : vector<8x8xf32>
    %84 = vector.broadcast %79 : vector<1x8xf32> to vector<8x8xf32>
    %85 = arith.addf %83, %84 : vector<8x8xf32>
    %cst_61 = arith.constant dense<0xFF800000> : vector<8xf32>
    %86 = vector.multi_reduction <maximumf>, %85, %cst_61 [1] : vector<8x8xf32> to vector<8xf32>
    %87 = vector.shape_cast %86 : vector<8xf32> to vector<8x1xf32>
    %88 = vector.broadcast %87 : vector<8x1xf32> to vector<8x8xf32>
    %89 = arith.subf %85, %88 : vector<8x8xf32>
    %90 = math.exp %89 : vector<8x8xf32>
    %cst_62 = arith.constant dense<0.000000e+00> : vector<8xf32>
    %91 = vector.multi_reduction <add>, %90, %cst_62 [1] : vector<8x8xf32> to vector<8xf32>
    %92 = vector.shape_cast %91 : vector<8xf32> to vector<8x1xf32>
    %93 = tpu.reciprocal %92 {approx = true} : vector<8x1xf32> -> vector<8x1xf32>
    %94 = vector.broadcast %93 : vector<8x1xf32> to vector<8x8xf32>
    %95 = arith.mulf %90, %94 : vector<8x8xf32>
    %cst_63 = arith.constant dense<0.000000e+00> : vector<8x32xf32>
    %96 = tpu.matmul %95, %72, %cst_63 {dimension_numbers = #tpu.dot_dimension_numbers<[1], [0], [0], [1], [0, 0, 1, 1], [], []>} : vector<8x8xf32>, vector<8x32xf32>, vector<8x32xf32> -> vector<8x32xf32>
    %c0_64 = arith.constant 0 : index
    %c128 = arith.constant 128 : index
    %97 = vector.load %arg5[%c0_64, %c128] : memref<32x512xf32, #tpu.memory_space<vmem>>, vector<32x32xf32>
    %cst_65 = arith.constant dense<0.000000e+00> : vector<8x32xf32>
    %98 = tpu.matmul %96, %97, %cst_65 {dimension_numbers = #tpu.dot_dimension_numbers<[1], [0], [0], [1], [0, 0, 1, 1], [], []>} : vector<8x32xf32>, vector<32x32xf32>, vector<8x32xf32> -> vector<8x32xf32>
    %c1_66 = arith.constant 1 : index
    %c0_67 = arith.constant 0 : index
    %99 = vector.load %arg8[%c1_66, %c0_67] : memref<16x256xf32, #tpu.memory_space<vmem>>, vector<1x32xf32>
    %100 = vector.broadcast %99 : vector<1x32xf32> to vector<8x32xf32>
    %101 = arith.addf %98, %100 : vector<8x32xf32>
    %102 = arith.addf %64, %101 : vector<8x32xf32>
    %c2_68 = arith.constant 2 : index
    %c0_69 = arith.constant 0 : index
    %103 = vector.load %arg8[%c2_68, %c0_69] : memref<16x256xf32, #tpu.memory_space<vmem>>, vector<1x32xf32>
    %c3_70 = arith.constant 3 : index
    %c0_71 = arith.constant 0 : index
    %104 = vector.load %arg8[%c3_70, %c0_71] : memref<16x256xf32, #tpu.memory_space<vmem>>, vector<1x32xf32>
    %cst_72 = arith.constant dense<0.000000e+00> : vector<8xf32>
    %105 = vector.multi_reduction <add>, %102, %cst_72 [1] : vector<8x32xf32> to vector<8xf32>
    %106 = vector.shape_cast %105 : vector<8xf32> to vector<8x1xf32>
    %cst_73 = arith.constant 3.200000e+01 : f32
    %107 = vector.broadcast %cst_73 : f32 to vector<8x1xf32>
    %108 = arith.divf %106, %107 : vector<8x1xf32>
    %109 = vector.broadcast %108 : vector<8x1xf32> to vector<8x32xf32>
    %110 = arith.subf %102, %109 : vector<8x32xf32>
    %111 = arith.mulf %110, %110 : vector<8x32xf32>
    %cst_74 = arith.constant dense<0.000000e+00> : vector<8xf32>
    %112 = vector.multi_reduction <add>, %111, %cst_74 [1] : vector<8x32xf32> to vector<8xf32>
    %113 = vector.shape_cast %112 : vector<8xf32> to vector<8x1xf32>
    %cst_75 = arith.constant 3.200000e+01 : f32
    %114 = vector.broadcast %cst_75 : f32 to vector<8x1xf32>
    %115 = arith.divf %113, %114 : vector<8x1xf32>
    %116 = vector.broadcast %108 : vector<8x1xf32> to vector<8x32xf32>
    %117 = arith.subf %102, %116 : vector<8x32xf32>
    %cst_76 = arith.constant 9.99999974E-6 : f32
    %118 = vector.broadcast %cst_76 : f32 to vector<8x1xf32>
    %119 = arith.addf %115, %118 : vector<8x1xf32>
    %120 = math.rsqrt %119 : vector<8x1xf32>
    %121 = vector.broadcast %120 : vector<8x1xf32> to vector<8x32xf32>
    %122 = arith.mulf %117, %121 : vector<8x32xf32>
    %123 = vector.broadcast %103 : vector<1x32xf32> to vector<8x32xf32>
    %124 = arith.mulf %122, %123 : vector<8x32xf32>
    %125 = vector.broadcast %104 : vector<1x32xf32> to vector<8x32xf32>
    %126 = arith.addf %124, %125 : vector<8x32xf32>
    %c0_77 = arith.constant 0 : index
    %c256 = arith.constant 256 : index
    %127 = vector.load %arg5[%c0_77, %c256] : memref<32x512xf32, #tpu.memory_space<vmem>>, vector<32x64xf32>
    %cst_78 = arith.constant dense<0.000000e+00> : vector<8x64xf32>
    %128 = tpu.matmul %126, %127, %cst_78 {dimension_numbers = #tpu.dot_dimension_numbers<[1], [0], [0], [1], [0, 0, 1, 1], [], []>} : vector<8x32xf32>, vector<32x64xf32>, vector<8x64xf32> -> vector<8x64xf32>
    %c4_79 = arith.constant 4 : index
    %c0_80 = arith.constant 0 : index
    %129 = vector.load %arg8[%c4_79, %c0_80] : memref<16x256xf32, #tpu.memory_space<vmem>>, vector<1x64xf32>
    %130 = vector.broadcast %129 : vector<1x64xf32> to vector<8x64xf32>
    %131 = arith.addf %128, %130 : vector<8x64xf32>
    %132 = arith.mulf %131, %131 : vector<8x64xf32>
    %133 = arith.mulf %131, %132 : vector<8x64xf32>
    %cst_81 = arith.constant 4.471500e-02 : f32
    %134 = vector.broadcast %cst_81 : f32 to vector<8x64xf32>
    %135 = arith.mulf %134, %133 : vector<8x64xf32>
    %136 = arith.addf %131, %135 : vector<8x64xf32>
    %cst_82 = arith.constant 0.797884583 : f32
    %137 = vector.broadcast %cst_82 : f32 to vector<8x64xf32>
    %138 = arith.mulf %137, %136 : vector<8x64xf32>
    %139 = math.tanh %138 : vector<8x64xf32>
    %cst_83 = arith.constant 1.000000e+00 : f32
    %140 = vector.broadcast %cst_83 : f32 to vector<8x64xf32>
    %141 = arith.addf %140, %139 : vector<8x64xf32>
    %cst_84 = arith.constant 5.000000e-01 : f32
    %142 = vector.broadcast %cst_84 : f32 to vector<8x64xf32>
    %143 = arith.mulf %142, %141 : vector<8x64xf32>
    %144 = arith.mulf %131, %143 : vector<8x64xf32>
    %c0_85 = arith.constant 0 : index
    %c0_86 = arith.constant 0 : index
    %145 = vector.load %arg6[%c0_85, %c0_86] : memref<64x32xf32, #tpu.memory_space<vmem>>, vector<64x32xf32>
    %cst_87 = arith.constant dense<0.000000e+00> : vector<8x32xf32>
    %146 = tpu.matmul %144, %145, %cst_87 {dimension_numbers = #tpu.dot_dimension_numbers<[1], [0], [0], [1], [0, 0, 1, 1], [], []>} : vector<8x64xf32>, vector<64x32xf32>, vector<8x32xf32> -> vector<8x32xf32>
    %c5_88 = arith.constant 5 : index
    %c0_89 = arith.constant 0 : index
    %147 = vector.load %arg8[%c5_88, %c0_89] : memref<16x256xf32, #tpu.memory_space<vmem>>, vector<1x32xf32>
    %148 = vector.broadcast %147 : vector<1x32xf32> to vector<8x32xf32>
    %149 = arith.addf %146, %148 : vector<8x32xf32>
    %150 = arith.addf %126, %149 : vector<8x32xf32>
    %c6_90 = arith.constant 6 : index
    %c0_91 = arith.constant 0 : index
    %151 = vector.load %arg8[%c6_90, %c0_91] : memref<16x256xf32, #tpu.memory_space<vmem>>, vector<1x32xf32>
    %c7_92 = arith.constant 7 : index
    %c0_93 = arith.constant 0 : index
    %152 = vector.load %arg8[%c7_92, %c0_93] : memref<16x256xf32, #tpu.memory_space<vmem>>, vector<1x32xf32>
    %cst_94 = arith.constant dense<0.000000e+00> : vector<8xf32>
    %153 = vector.multi_reduction <add>, %150, %cst_94 [1] : vector<8x32xf32> to vector<8xf32>
    %154 = vector.shape_cast %153 : vector<8xf32> to vector<8x1xf32>
    %cst_95 = arith.constant 3.200000e+01 : f32
    %155 = vector.broadcast %cst_95 : f32 to vector<8x1xf32>
    %156 = arith.divf %154, %155 : vector<8x1xf32>
    %157 = vector.broadcast %156 : vector<8x1xf32> to vector<8x32xf32>
    %158 = arith.subf %150, %157 : vector<8x32xf32>
    %159 = arith.mulf %158, %158 : vector<8x32xf32>
    %cst_96 = arith.constant dense<0.000000e+00> : vector<8xf32>
    %160 = vector.multi_reduction <add>, %159, %cst_96 [1] : vector<8x32xf32> to vector<8xf32>
    %161 = vector.shape_cast %160 : vector<8xf32> to vector<8x1xf32>
    %cst_97 = arith.constant 3.200000e+01 : f32
    %162 = vector.broadcast %cst_97 : f32 to vector<8x1xf32>
    %163 = arith.divf %161, %162 : vector<8x1xf32>
    %164 = vector.broadcast %156 : vector<8x1xf32> to vector<8x32xf32>
    %165 = arith.subf %150, %164 : vector<8x32xf32>
    %cst_98 = arith.constant 9.99999974E-6 : f32
    %166 = vector.broadcast %cst_98 : f32 to vector<8x1xf32>
    %167 = arith.addf %163, %166 : vector<8x1xf32>
    %168 = math.rsqrt %167 : vector<8x1xf32>
    %169 = vector.broadcast %168 : vector<8x1xf32> to vector<8x32xf32>
    %170 = arith.mulf %165, %169 : vector<8x32xf32>
    %171 = vector.broadcast %151 : vector<1x32xf32> to vector<8x32xf32>
    %172 = arith.mulf %170, %171 : vector<8x32xf32>
    %173 = vector.broadcast %152 : vector<1x32xf32> to vector<8x32xf32>
    %174 = arith.addf %172, %173 : vector<8x32xf32>
    %175 = vector.extract_strided_slice %174 {offsets = [0, 0], sizes = [1, 32], strides = [1, 1]} : vector<8x32xf32> to vector<1x32xf32>
    %c0_99 = arith.constant 0 : index
    %c384 = arith.constant 384 : index
    %176 = vector.load %arg5[%c0_99, %c384] : memref<32x512xf32, #tpu.memory_space<vmem>>, vector<32x32xf32>
    %cst_100 = arith.constant dense<0.000000e+00> : vector<1x32xf32>
    %177 = tpu.matmul %175, %176, %cst_100 {dimension_numbers = #tpu.dot_dimension_numbers<[1], [0], [0], [1], [0, 0, 1, 1], [], []>} : vector<1x32xf32>, vector<32x32xf32>, vector<1x32xf32> -> vector<1x32xf32>
    %c8 = arith.constant 8 : index
    %c0_101 = arith.constant 0 : index
    %178 = vector.load %arg8[%c8, %c0_101] : memref<16x256xf32, #tpu.memory_space<vmem>>, vector<1x32xf32>
    %179 = arith.addf %177, %178 : vector<1x32xf32>
    %180 = math.tanh %179 : vector<1x32xf32>
    %c0_102 = arith.constant 0 : index
    %c0_103 = arith.constant 0 : index
    %181 = vector.load %arg7[%c0_102, %c0_103] : memref<32x256xf32, #tpu.memory_space<vmem>>, vector<32x128xf32>
    %cst_104 = arith.constant dense<0.000000e+00> : vector<1x128xf32>
    %182 = tpu.matmul %180, %181, %cst_104 {dimension_numbers = #tpu.dot_dimension_numbers<[1], [0], [0], [1], [0, 0, 1, 1], [], []>} : vector<1x32xf32>, vector<32x128xf32>, vector<1x128xf32> -> vector<1x128xf32>
    %c9 = arith.constant 9 : index
    %c0_105 = arith.constant 0 : index
    %183 = vector.load %arg8[%c9, %c0_105] : memref<16x256xf32, #tpu.memory_space<vmem>>, vector<1x128xf32>
    %184 = arith.addf %182, %183 : vector<1x128xf32>
    %c0_106 = arith.constant 0 : index
    %c0_107 = arith.constant 0 : index
    %c0_108 = arith.constant 0 : index
    %185 = vector.load %arg9[%c0_106, %c0_107, %c0_108] : memref<1x1x128xf32, #tpu.memory_space<vmem>>, vector<1x1x128xf32>
    %186 = vector.shape_cast %185 : vector<1x1x128xf32> to vector<1x128xf32>
    %187 = vector.shape_cast %184 : vector<1x128xf32> to vector<1x1x128xf32>
    tpu.vector_store %arg9[%c0_106, %c0_107, %c0_108], %187 {strides = array<i32>} : memref<1x1x128xf32, #tpu.memory_space<vmem>>, vector<1x1x128xf32>,
    %c0_109 = arith.constant 0 : index
    %c128_110 = arith.constant 128 : index
    %188 = vector.load %arg7[%c0_109, %c128_110] : memref<32x256xf32, #tpu.memory_space<vmem>>, vector<32x128xf32>
    %cst_111 = arith.constant dense<0.000000e+00> : vector<8x128xf32>
    %189 = tpu.matmul %174, %188, %cst_111 {dimension_numbers = #tpu.dot_dimension_numbers<[1], [0], [0], [1], [0, 0, 1, 1], [], []>} : vector<8x32xf32>, vector<32x128xf32>, vector<8x128xf32> -> vector<8x128xf32>
    %c10 = arith.constant 10 : index
    %c0_112 = arith.constant 0 : index
    %190 = vector.load %arg8[%c10, %c0_112] : memref<16x256xf32, #tpu.memory_space<vmem>>, vector<1x128xf32>
    %191 = vector.broadcast %190 : vector<1x128xf32> to vector<8x128xf32>
    %192 = arith.addf %189, %191 : vector<8x128xf32>
    %c0_113 = arith.constant 0 : index
    %c0_114 = arith.constant 0 : index
    %c0_115 = arith.constant 0 : index
    %193 = vector.load %arg10[%c0_113, %c0_114, %c0_115] : memref<1x8x128xf32, #tpu.memory_space<vmem>>, vector<1x8x128xf32>
    %194 = vector.shape_cast %193 : vector<1x8x128xf32> to vector<8x128xf32>
    %195 = vector.shape_cast %192 : vector<8x128xf32> to vector<1x8x128xf32>
    tpu.vector_store %arg10[%c0_113, %c0_114, %c0_115], %195 {strides = array<i32>} : memref<1x8x128xf32, #tpu.memory_space<vmem>>, vector<1x8x128xf32>,
    return
  }
  func.func @transform_0(%arg0: i32, %arg1: memref<2x8xi32, #tpu.memory_space<smem>>) -> (i32, i32, i32) {
    %c0_i32 = arith.constant 0 : i32
    %c0_i32_0 = arith.constant 0 : i32
    %c0_i32_1 = arith.constant 0 : i32
    return %arg0, %c0_i32, %c0_i32_0 : i32, i32, i32
  }
  func.func @transform_1(%arg0: i32, %arg1: memref<2x8xi32, #tpu.memory_space<smem>>) -> (i32, i32, i32) {
    %c0_i32 = arith.constant 0 : i32
    %c0_i32_0 = arith.constant 0 : i32
    %c0_i32_1 = arith.constant 0 : i32
    %c0_i32_2 = arith.constant 0 : i32
    return %c0_i32, %c0_i32_0, %c0_i32_1 : i32, i32, i32
  }
  func.func @transform_2(%arg0: i32, %arg1: memref<2x8xi32, #tpu.memory_space<smem>>) -> (i32, i32) {
    %c0_i32 = arith.constant 0 : i32
    %c0_i32_0 = arith.constant 0 : i32
    %c0_i32_1 = arith.constant 0 : i32
    return %c0_i32, %c0_i32_0 : i32, i32
  }
  func.func @transform_3(%arg0: i32, %arg1: memref<2x8xi32, #tpu.memory_space<smem>>) -> (i32, i32) {
    %c0_i32 = arith.constant 0 : i32
    %c0_i32_0 = arith.constant 0 : i32
    %c0_i32_1 = arith.constant 0 : i32
    return %c0_i32, %c0_i32_0 : i32, i32
  }
  func.func @transform_4(%arg0: i32, %arg1: memref<2x8xi32, #tpu.memory_space<smem>>) -> (i32, i32) {
    %c0_i32 = arith.constant 0 : i32
    %c0_i32_0 = arith.constant 0 : i32
    %c0_i32_1 = arith.constant 0 : i32
    return %c0_i32, %c0_i32_0 : i32, i32
  }
  func.func @transform_5(%arg0: i32, %arg1: memref<2x8xi32, #tpu.memory_space<smem>>) -> (i32, i32) {
    %c0_i32 = arith.constant 0 : i32
    %c0_i32_0 = arith.constant 0 : i32
    %c0_i32_1 = arith.constant 0 : i32
    return %c0_i32, %c0_i32_0 : i32, i32
  }
  func.func @transform_6(%arg0: i32, %arg1: memref<2x8xi32, #tpu.memory_space<smem>>) -> (i32, i32) {
    %c0_i32 = arith.constant 0 : i32
    %c0_i32_0 = arith.constant 0 : i32
    %c0_i32_1 = arith.constant 0 : i32
    return %c0_i32, %c0_i32_0 : i32, i32
  }
  func.func @transform_7(%arg0: i32, %arg1: memref<2x8xi32, #tpu.memory_space<smem>>) -> (i32, i32, i32) {
    %c0_i32 = arith.constant 0 : i32
    %c0_i32_0 = arith.constant 0 : i32
    %c0_i32_1 = arith.constant 0 : i32
    return %arg0, %c0_i32, %c0_i32_0 : i32, i32, i32
  }
  func.func @transform_8(%arg0: i32, %arg1: memref<2x8xi32, #tpu.memory_space<smem>>) -> (i32, i32, i32) {
    %c0_i32 = arith.constant 0 : i32
    %c0_i32_0 = arith.constant 0 : i32
    %c0_i32_1 = arith.constant 0 : i32
    return %arg0, %c0_i32, %c0_i32_0 : i32, i32, i32
  }
}

</mosaic_0001>

<llo_original>
// kernel: intent_slot_forward.1
$region0: #{intent_slot_forward.1}
  #allocation0 [shape = 'u32[]', space=smem, size = 0x4, offset = 0x4, fixed_abs, tag = 'smem constant byte address 0x4 - core index']
  #allocation1 [shape = 'u32[144,128]{1,0:T(1,128)}', space=vmem, size = 0x12000, scoped, tag = 'internal scratch']
  #allocation2 [shape = 'f32[8,32]{1,0:T(8,128)}', space=vmem, size = 0x1000, scoped, tag = 'scratch operand']
  #allocation3 [shape = 's32[1]{0}', space=sflag, size = 0x4, scoped, tag = 'scoped memory for intent_slot_forward.1']
  #allocation4 [shape = 'u8[1024]{0}', space=smem, size = 0x400, scoped, tag = 'prefetched SMEM operand 0']
  %s0 = inlined_call_operand.vmem [shape: s32[2,8], index: 0, kind: input, shape index: {}]
  %s1 = inlined_call_operand.vmem [shape: s32[2,1,8], index: 1, kind: input, shape index: {}]
  %s2 = inlined_call_operand.vmem [shape: f32[100,1,32], index: 2, kind: input, shape index: {}]
  %s3 = inlined_call_operand.vmem [shape: f32[8,32], index: 3, kind: input, shape index: {}]
  %s4 = inlined_call_operand.vmem [shape: f32[32,512], index: 4, kind: input, shape index: {}]
  %s5 = inlined_call_operand.vmem [shape: f32[64,32], index: 5, kind: input, shape index: {}]
  %s6 = inlined_call_operand.vmem [shape: f32[32,256], index: 6, kind: input, shape index: {}]
  %s7 = inlined_call_operand.vmem [shape: f32[16,256], index: 7, kind: input, shape index: {}]
  %s8 = inlined_call_operand.hbm [shape: f32[2,1,128], index: 8, kind: output, shape index: {0}]
  %s9 = inlined_call_operand.vmem [shape: f32[2,8,128], index: 9, kind: output, shape index: {1}]
  %10 = xla_tuple %s8, %s9
  %s11 = sld [smem:[#allocation0]]
  $region69: #{intent_slot_forward.1} parent=0
    _
  %s13 = ssub.s32 1, %s11
  %s14 = scalar_select 0, %s13, %s11
  %s15 = sshll.u32 %s0, 4
  %s16 = int_to_ptr.vmem [resolvable:$true] %s15
  %18 = dma.vmem_to_smem %s16, 32, [#allocation4], [#allocation3]
  %19 = dma.done [#allocation3], 32
  %20 = sfence
  $region1: #{intent_slot_forward.1} parent=0
    #allocation5 [shape = 'u8[1024]{0}', space=vmem, size = 0x400, scoped, tag = 'output window, operand 0']
    #allocation6 [shape = 's32[2]{0}', space=sflag, size = 0x8, scoped, tag = 'scoped memory for intent_slot_forward.1']
    %21 = vsyncpa [#allocation6], 0
    %s22 = scalar_lea.sflag [#allocation6], 1
    %23 = vsyncpa %s22, 0
    loop: start=0, step=1, limit=4
    $region2: #{intent_slot_forward.1} parent=1 // loop_pre_header
      _
    $region3: #{intent_slot_forward.1} parent=1 // loop_header
      %s25 = sphi 0, %s29
      %p26 = scmp.ge.s32.totalorder %s25, 4
      %s35 = sphi 0, %s37
      %s38 = sphi 0, %s35
      %s39 = sphi 0, %s38
      %s55 = sphi 0, %s39
      %s59 = sphi 0, %s59
      %s61 = sphi 0, %s59
      %s62 = sphi 0, %s61
      %s76 = sphi 0, %s62
      %s80 = sphi 0, %s80
      %s82 = sphi 0, %s80
      %s83 = sphi 0, %s82
      %s97 = sphi 0, %s83
      %s101 = sphi 0, %s101
      %s103 = sphi 0, %s101
      %s104 = sphi 0, %s103
      %s118 = sphi 0, %s104
      %s122 = sphi 0, %s122
      %s124 = sphi 0, %s122
      %s125 = sphi 0, %s124
      %s139 = sphi 0, %s125
      %s143 = sphi 0, %s143
      %s145 = sphi 0, %s143
      %s146 = sphi 0, %s145
      %s160 = sphi 0, %s146
      %s164 = sphi 0, %s164
      %s166 = sphi 0, %s164
      %s167 = sphi 0, %s166
      %s181 = sphi 0, %s167
      %s187 = sphi 0, %s189
      %s190 = sphi 0, %s187
      %s191 = sphi 0, %s190
      %s207 = sphi 0, %s191
      %s213 = sphi 0, %s215
      %s216 = sphi 0, %s213
      %s217 = sphi 0, %s216
      %s233 = sphi 0, %s217
    $region4: #{intent_slot_forward.1} parent=1 // loop_header_branch
      %28 = sbr.rel (%p26) target = $region8
    $region5: #{intent_slot_forward.1} parent=1 // loop_body
      %s30 = ssub.s32 %s25, 1
      %s31 = ssub.s32 %s25, 2
      %s32 = sadd.s32 %s25, 1
      %s33 = ssub.s32 %s25, %s32
      %p34 = scmp.eq.s32.totalorder %s33, 0
      %s36 = sadd.s32 %s35, 1
      %s37 = scalar_select %p34, %s35, %s36
      %p40 = pneg %p34
      %p41 = scmp.eq.s32.totalorder %s25, 1
      %p42 = por %p40, %p41
      %p43 = scmp.ne.s32.totalorder %s35, %s38
      %p44 = scmp.eq.s32.totalorder %s25, 0
      %p45 = por %p43, %p44
      %p46 = scmp.ne.s32.totalorder %s35, %s38
      %p47 = scmp.eq.s32.totalorder %s30, 1
      %p48 = por %p46, %p47
      %p49 = scmp.ne.s32.totalorder %s38, %s39
      %p50 = scmp.eq.s32.totalorder %s30, 0
      %p51 = por %p49, %p50
      %p52 = scmp.ne.s32.totalorder %s38, %s39
      %p53 = scmp.eq.s32.totalorder %s31, 1
      %p54 = por %p52, %p53
      %p56 = scmp.ne.s32.totalorder %s39, %s55
      %p57 = scmp.eq.s32.totalorder %s31, 0
      %p58 = por %p56, %p57
      %s60 = sadd.s32 %s59, 1
      %p63 = scmp.eq.s32.totalorder %s25, 1
      %p64 = scmp.ne.s32.totalorder %s59, %s61
      %p65 = scmp.eq.s32.totalorder %s25, 0
      %p66 = por %p64, %p65
      %p67 = scmp.ne.s32.totalorder %s59, %s61
      %p68 = scmp.eq.s32.totalorder %s30, 1
      %p69 = por %p67, %p68
      %p70 = scmp.ne.s32.totalorder %s61, %s62
      %p71 = scmp.eq.s32.totalorder %s30, 0
      %p72 = por %p70, %p71
      %p73 = scmp.ne.s32.totalorder %s61, %s62
      %p74 = scmp.eq.s32.totalorder %s31, 1
      %p75 = por %p73, %p74
      %p77 = scmp.ne.s32.totalorder %s62, %s76
      %p78 = scmp.eq.s32.totalorder %s31, 0
      %p79 = por %p77, %p78
      %s81 = sadd.s32 %s80, 1
      %p84 = scmp.eq.s32.totalorder %s25, 1
      %p85 = scmp.ne.s32.totalorder %s80, %s82
      %p86 = scmp.eq.s32.totalorder %s25, 0
      %p87 = por %p85, %p86
      %p88 = scmp.ne.s32.totalorder %s80, %s82
      %p89 = scmp.eq.s32.totalorder %s30, 1
      %p90 = por %p88, %p89
      %p91 = scmp.ne.s32.totalorder %s82, %s83
      %p92 = scmp.eq.s32.totalorder %s30, 0
      %p93 = por %p91, %p92
      %p94 = scmp.ne.s32.totalorder %s82, %s83
      %p95 = scmp.eq.s32.totalorder %s31, 1
      %p96 = por %p94, %p95
      %p98 = scmp.ne.s32.totalorder %s83, %s97
      %p99 = scmp.eq.s32.totalorder %s31, 0
      %p100 = por %p98, %p99
      %s102 = sadd.s32 %s101, 1
      %p105 = scmp.eq.s32.totalorder %s25, 1
      %p106 = scmp.ne.s32.totalorder %s101, %s103
      %p107 = scmp.eq.s32.totalorder %s25, 0
      %p108 = por %p106, %p107
      %p109 = scmp.ne.s32.totalorder %s101, %s103
      %p110 = scmp.eq.s32.totalorder %s30, 1
      %p111 = por %p109, %p110
      %p112 = scmp.ne.s32.totalorder %s103, %s104
      %p113 = scmp.eq.s32.totalorder %s30, 0
      %p114 = por %p112, %p113
      %p115 = scmp.ne.s32.totalorder %s103, %s104
      %p116 = scmp.eq.s32.totalorder %s31, 1
      %p117 = por %p115, %p116
      %p119 = scmp.ne.s32.totalorder %s104, %s118
      %p120 = scmp.eq.s32.totalorder %s31, 0
      %p121 = por %p119, %p120
      %s123 = sadd.s32 %s122, 1
      %p126 = scmp.eq.s32.totalorder %s25, 1
      %p127 = scmp.ne.s32.totalorder %s122, %s124
      %p128 = scmp.eq.s32.totalorder %s25, 0
      %p129 = por %p127, %p128
      %p130 = scmp.ne.s32.totalorder %s122, %s124
      %p131 = scmp.eq.s32.totalorder %s30, 1
      %p132 = por %p130, %p131
      %p133 = scmp.ne.s32.totalorder %s124, %s125
      %p134 = scmp.eq.s32.totalorder %s30, 0
      %p135 = por %p133, %p134
      %p136 = scmp.ne.s32.totalorder %s124, %s125
      %p137 = scmp.eq.s32.totalorder %s31, 1
      %p138 = por %p136, %p137
      %p140 = scmp.ne.s32.totalorder %s125, %s139
      %p141 = scmp.eq.s32.totalorder %s31, 0
      %p142 = por %p140, %p141
      %s144 = sadd.s32 %s143, 1
      %p147 = scmp.eq.s32.totalorder %s25, 1
      %p148 = scmp.ne.s32.totalorder %s143, %s145
      %p149 = scmp.eq.s32.totalorder %s25, 0
      %p150 = por %p148, %p149
      %p151 = scmp.ne.s32.totalorder %s143, %s145
      %p152 = scmp.eq.s32.totalorder %s30, 1
      %p153 = por %p151, %p152
      %p154 = scmp.ne.s32.totalorder %s145, %s146
      %p155 = scmp.eq.s32.totalorder %s30, 0
      %p156 = por %p154, %p155
      %p157 = scmp.ne.s32.totalorder %s145, %s146
      %p158 = scmp.eq.s32.totalorder %s31, 1
      %p159 = por %p157, %p158
      %p161 = scmp.ne.s32.totalorder %s146, %s160
      %p162 = scmp.eq.s32.totalorder %s31, 0
      %p163 = por %p161, %p162
      %s165 = sadd.s32 %s164, 1
      %p168 = scmp.eq.s32.totalorder %s25, 1
      %p169 = scmp.ne.s32.totalorder %s164, %s166
      %p170 = scmp.eq.s32.totalorder %s25, 0
      %p171 = por %p169, %p170
      %p172 = scmp.ne.s32.totalorder %s164, %s166
      %p173 = scmp.eq.s32.totalorder %s30, 1
      %p174 = por %p172, %p173
      %p175 = scmp.ne.s32.totalorder %s166, %s167
      %p176 = scmp.eq.s32.totalorder %s30, 0
      %p177 = por %p175, %p176
      %p178 = scmp.ne.s32.totalorder %s166, %s167
      %p179 = scmp.eq.s32.totalorder %s31, 1
      %p180 = por %p178, %p179
      %p182 = scmp.ne.s32.totalorder %s167, %s181
      %p183 = scmp.eq.s32.totalorder %s31, 0
      %p184 = por %p182, %p183
      %s185 = ssub.s32 %s25, %s32
      %p186 = scmp.eq.s32.totalorder %s185, 0
      %s188 = sadd.s32 %s187, 1
      %s189 = scalar_select %p186, %s187, %s188
      %p192 = pneg %p186
      %p193 = scmp.eq.s32.totalorder %s25, 1
      %p194 = por %p192, %p193
      %p195 = scmp.ne.s32.totalorder %s187, %s190
      %p196 = scmp.eq.s32.totalorder %s25, 0
      %p197 = por %p195, %p196
      %p198 = scmp.ne.s32.totalorder %s187, %s190
      %p199 = scmp.eq.s32.totalorder %s30, 1
      %p200 = por %p198, %p199
      %p201 = scmp.ne.s32.totalorder %s190, %s191
      %p202 = scmp.eq.s32.totalorder %s30, 0
      %p203 = por %p201, %p202
      %p204 = scmp.ne.s32.totalorder %s190, %s191
      %p205 = scmp.eq.s32.totalorder %s31, 1
      %p206 = por %p204, %p205
      %p208 = scmp.ne.s32.totalorder %s191, %s207
      %p209 = scmp.eq.s32.totalorder %s31, 0
      %p210 = por %p208, %p209
      %s211 = ssub.s32 %s25, %s32
      %p212 = scmp.eq.s32.totalorder %s211, 0
      %s214 = sadd.s32 %s213, 1
      %s215 = scalar_select %p212, %s213, %s214
      %p218 = pneg %p212
      %p219 = scmp.eq.s32.totalorder %s25, 1
      %p220 = por %p218, %p219
      %p221 = scmp.ne.s32.totalorder %s213, %s216
      %p222 = scmp.eq.s32.totalorder %s25, 0
      %p223 = por %p221, %p222
      %p224 = scmp.ne.s32.totalorder %s213, %s216
      %p225 = scmp.eq.s32.totalorder %s30, 1
      %p226 = por %p224, %p225
      %p227 = scmp.ne.s32.totalorder %s216, %s217
      %p228 = scmp.eq.s32.totalorder %s30, 0
      %p229 = por %p227, %p228
      %p230 = scmp.ne.s32.totalorder %s216, %s217
      %p231 = scmp.eq.s32.totalorder %s31, 1
      %p232 = por %p230, %p231
      %p234 = scmp.ne.s32.totalorder %s217, %s233
      %p235 = scmp.eq.s32.totalorder %s31, 0
      %p236 = por %p234, %p235
      %p237 = scmp.le.s32.totalorder 1, %s25
      %p238 = scmp.lt.s32.totalorder %s25, 3
      %p239 = pnand %p237, %p238
      %p240 = pneg %p239
      // Predicated region
      $region9: #{intent_slot_forward.1} parent=5 // pred_check
        _
      $region10: #{intent_slot_forward.1} parent=5 // pred_check_branch
        %242 = sbr.rel (%p239) target = $region12
      $region11: #{intent_slot_forward.1} parent=5 // pred_region
        %s243 = ssub.s32 %s25, 1
        // Predicated region
        $region13: #{intent_slot_forward.1} parent=11 // pred_check
          %p244 = pneg %p72
        $region14: #{intent_slot_forward.1} parent=11 // pred_check_branch
          %246 = sbr.rel (%p244) target = $region16
        $region15: #{intent_slot_forward.1} parent=11 // pred_region
          _
        $region16: #{intent_slot_forward.1} parent=11 // pred_fallthru
          _
        // Predicated region
        $region17: #{intent_slot_forward.1} parent=11 // pred_check
          %p247 = pneg %p93
        $region18: #{intent_slot_forward.1} parent=11 // pred_check_branch
          %249 = sbr.rel (%p247) target = $region20
        $region19: #{intent_slot_forward.1} parent=11 // pred_region
          _
        $region20: #{intent_slot_forward.1} parent=11 // pred_fallthru
          _
        // Predicated region
        $region21: #{intent_slot_forward.1} parent=11 // pred_check
          %p250 = pneg %p114
        $region22: #{intent_slot_forward.1} parent=11 // pred_check_branch
          %252 = sbr.rel (%p250) target = $region24
        $region23: #{intent_slot_forward.1} parent=11 // pred_region
          _
        $region24: #{intent_slot_forward.1} parent=11 // pred_fallthru
          _
        // Predicated region
        $region25: #{intent_slot_forward.1} parent=11 // pred_check
          %p253 = pneg %p135
        $region26: #{intent_slot_forward.1} parent=11 // pred_check_branch
          %255 = sbr.rel (%p253) target = $region28
        $region27: #{intent_slot_forward.1} parent=11 // pred_region
          _
        $region28: #{intent_slot_forward.1} parent=11 // pred_fallthru
          _
        // Predicated region
        $region29: #{intent_slot_forward.1} parent=11 // pred_check
          %p256 = pneg %p156
        $region30: #{intent_slot_forward.1} parent=11 // pred_check_branch
          %258 = sbr.rel (%p256) target = $region32
        $region31: #{intent_slot_forward.1} parent=11 // pred_region
          _
        $region32: #{intent_slot_forward.1} parent=11 // pred_fallthru
          _
        // Predicated region
        $region33: #{intent_slot_forward.1} parent=11 // pred_check
          %p259 = pneg %p177
        $region34: #{intent_slot_forward.1} parent=11 // pred_check_branch
          %261 = sbr.rel (%p259) target = $region36
        $region35: #{intent_slot_forward.1} parent=11 // pred_region
          _
        $region36: #{intent_slot_forward.1} parent=11 // pred_fallthru
          _
      $region12: #{intent_slot_forward.1} parent=5 // pred_fallthru
        _
      %p262 = scmp.lt.s32.totalorder %s25, 2
      // Predicated region
      $region37: #{intent_slot_forward.1} parent=5 // pred_check
        %p263 = pneg %p262
      $region38: #{intent_slot_forward.1} parent=5 // pred_check_branch
        %265 = sbr.rel (%p263) target = $region40
      $region39: #{intent_slot_forward.1} parent=5 // pred_region
        // Predicated region
        $region41: #{intent_slot_forward.1} parent=39 // pred_check
          %p266 = pneg %p45
        $region42: #{intent_slot_forward.1} parent=39 // pred_check_branch
          %268 = sbr.rel (%p266) target = $region44
        $region43: #{intent_slot_forward.1} parent=39 // pred_region
          %p269 = scmp.lt.s32.totalorder %s25, 1
          %s270 = scalar_select %p269, %s25, 1
          %s271 = scalar_lea.vmem %s1, %s270
        $region44: #{intent_slot_forward.1} parent=39 // pred_fallthru
          _
      $region40: #{intent_slot_forward.1} parent=5 // pred_fallthru
        _
      %p272 = scmp.le.s32.totalorder 1, %s25
      %p273 = scmp.lt.s32.totalorder %s25, 3
      %p274 = pnand %p272, %p273
      %p275 = pneg %p274
      // Predicated region
      $region45: #{intent_slot_forward.1} parent=5 // pred_check
        _
      $region46: #{intent_slot_forward.1} parent=5 // pred_check_branch
        %277 = sbr.rel (%p274) target = $region48
      $region47: #{intent_slot_forward.1} parent=5 // pred_region
        %s278 = ssub.s32 %s25, 1
        %p279 = scmp.lt.s32.totalorder %s30, 1
        %s280 = scalar_select %p279, %s30, 1
        %s281 = scalar_lea.vmem %s1, %s280
        %p282 = pneg %p51
        %p283 = pneg %p48
        %p284 = pneg %p72
        %p285 = pneg %p69
        %p286 = pneg %p93
        %p287 = pneg %p90
        %p288 = pneg %p114
        %p289 = pneg %p111
        %p290 = pneg %p135
        %p291 = pneg %p132
        %p292 = pneg %p156
        %p293 = pneg %p153
        %p294 = pneg %p177
        %p295 = pneg %p174
        %p296 = pneg %p203
        %p297 = pneg %p200
        %s298 = sand.u32 %s190, 1
        %s299 = scalar_lea.sflag [#allocation6], %s298
        %s300 = sand.u32 %s190, 1
        %s301 = scalar_lea.vmem [#allocation5], %s300
        %p302 = pneg %p229
        %p303 = pneg %p226
        %p304 = scmp.lt.s32.totalorder %s30, 1
        %s305 = scalar_select %p304, %s30, 1
        %s306 = smul.addr %s305, 8
        %s307 = scalar_lea.vmem %s9, %s306
        %p308 = scmp.lt.s32.totalorder %s30, 1
        %s309 = scalar_select %p308, %s30, 1
        %s310 = scalar_lea.vmem %s1, %s309
        %p311 = scmp.lt.s32.totalorder %s30, 1
        %s312 = scalar_select %p311, %s30, 1
        %s313 = smul.addr %s312, 8
        %s314 = scalar_lea.vmem %s9, %s313
        %s315 = smul.u32 %s30, 128
        %s316 = sld [smem:[#allocation4 + %s315]]
        %s317 = scalar_lea.vmem %s2, %s316
        %v318 = vld [vmem:[%s317] sm:$0x1]
        %v319 = vld [vmem:[%s3] sm:$0x1]
        %v320 = vadd.f32 %v318, %v319
        %vm321 = vcmask 253952
        %322 = vst.msk [vmem:[#allocation2] sm:$0x1] %vm321, %v320
        %s323 = sadd.s32 %s315, 1
        %s324 = sld [smem:[#allocation4 + %s323]]
        %s325 = scalar_lea.vmem %s2, %s324
        %v326 = vld [vmem:[%s325] sm:$0x1]
        %v327 = vld [vmem:[%s3 + $0x1] sm:$0x1]
        %v328 = vadd.f32 %v326, %v327
        %329 = vst.msk [vmem:[#allocation2 + $0x1] sm:$0x1] %vm321, %v328
        %s330 = sadd.s32 %s315, 2
        %s331 = sld [smem:[#allocation4 + %s330]]
        %s332 = scalar_lea.vmem %s2, %s331
        %v333 = vld [vmem:[%s332] sm:$0x1]
        %v334 = vld [vmem:[%s3 + $0x2] sm:$0x1]
        %v335 = vadd.f32 %v333, %v334
        %336 = vst.msk [vmem:[#allocation2 + $0x2] sm:$0x1] %vm321, %v335
        %s337 = sadd.s32 %s315, 3
        %s338 = sld [smem:[#allocation4 + %s337]]
        %s339 = scalar_lea.vmem %s2, %s338
        %v340 = vld [vmem:[%s339] sm:$0x1]
        %v341 = vld [vmem:[%s3 + $0x3] sm:$0x1]
        %v342 = vadd.f32 %v340, %v341
        %343 = vst.msk [vmem:[#allocation2 + $0x3] sm:$0x1] %vm321, %v342
        %s344 = sadd.s32 %s315, 4
        %s345 = sld [smem:[#allocation4 + %s344]]
        %s346 = scalar_lea.vmem %s2, %s345
        %v347 = vld [vmem:[%s346] sm:$0x1]
        %v348 = vld [vmem:[%s3 + $0x4] sm:$0x1]
        %v349 = vadd.f32 %v347, %v348
        %350 = vst.msk [vmem:[#allocation2 + $0x4] sm:$0x1] %vm321, %v349
        %s351 = sadd.s32 %s315, 5
        %s352 = sld [smem:[#allocation4 + %s351]]
        %s353 = scalar_lea.vmem %s2, %s352
        %v354 = vld [vmem:[%s353] sm:$0x1]
        %v355 = vld [vmem:[%s3 + $0x5] sm:$0x1]
        %v356 = vadd.f32 %v354, %v355
        %357 = vst.msk [vmem:[#allocation2 + $0x5] sm:$0x1] %vm321, %v356
        %s358 = sadd.s32 %s315, 6
        %s359 = sld [smem:[#allocation4 + %s358]]
        %s360 = scalar_lea.vmem %s2, %s359
        %v361 = vld [vmem:[%s360] sm:$0x1]
        %v362 = vld [vmem:[%s3 + $0x6] sm:$0x1]
        %v363 = vadd.f32 %v361, %v362
        %364 = vst.msk [vmem:[#allocation2 + $0x6] sm:$0x1] %vm321, %v363
        %s365 = sadd.s32 %s315, 7
        %s366 = sld [smem:[#allocation4 + %s365]]
        %s367 = scalar_lea.vmem %s2, %s366
        %v368 = vld [vmem:[%s367] sm:$0x1]
        %v369 = vld [vmem:[%s3 + $0x7] sm:$0x1]
        %v370 = vadd.f32 %v368, %v369
        %371 = vst.msk [vmem:[#allocation2 + $0x7] sm:$0x1] %vm321, %v370
        %v372 = vld [vmem:[#allocation2] sm:$0xff]
        %v373 = vld [vmem:[%s4] sm:$0xff]
        %v374 = vld [vmem:[%s4 + $0x20] sm:$0xff]
        %v375 = vld [vmem:[%s4 + $0x40] sm:$0xff]
        %v376 = vld [vmem:[%s4 + $0x60] sm:$0xff]
        %v377 = vld [vmem:[%s7] ss:$0 sm:$0xff]
        %vm378 = vcmask 261120
        %v380 = vsel %vm378, %v372, 0
        %382 = vmatprep.subr.mxu0 0.0
        %383 = vmatpush1.msra.mxu0 %v373
        %384 = vmatprep.subr.mxu0 0.0
        %385 = vmatpush1.msra.mxu0 %v374
        %386 = vmatprep.subr.mxu0 0.0
        %387 = vmatpush1.msra.mxu0 %v375
        %388 = vmatprep.subr.mxu0 0.0
        %389 = vmatpush1.msra.mxu0 %v376
        %390 = vmatprep.subr.mxu0 0.0
        %391 = vmatpush1.msra.mxu0 0.0
        %392 = vmatprep.subr.mxu0 0.0
        %393 = vmatpush1.msra.mxu0 0.0
        %394 = vmatprep.subr.mxu0 0.0
        %395 = vmatpush1.msra.mxu0 0.0
        %396 = vmatprep.subr.mxu0 0.0
        %397 = vmatpush1.msra.mxu0 0.0
        %398 = vmatprep.subr.mxu0 0.0
        %399 = vmatpush1.msra.mxu0 0.0
        %400 = vmatprep.subr.mxu0 0.0
        %401 = vmatpush1.msra.mxu0 0.0
        %402 = vmatprep.subr.mxu0 0.0
        %403 = vmatpush1.msra.mxu0 0.0
        %404 = vmatprep.subr.mxu0 0.0
        %405 = vmatpush1.msra.mxu0 0.0
        %406 = vmatprep.subr.mxu0 0.0
        %407 = vmatpush1.msra.mxu0 0.0
        %408 = vmatprep.subr.mxu0 0.0
        %409 = vmatpush1.msra.mxu0 0.0
        %410 = vmatprep.subr.mxu0 0.0
        %411 = vmatpush1.msra.mxu0 0.0
        %412 = vmatprep.subr.mxu0 0.0
        %413 = vmatpush1.msra.mxu0 0.0
        %414 = vmatprep.subr.mxu0 0.0
        %415 = vmatpush1.msra.mxu0 0.0
        %416 = vmatprep.subr.mxu0 0.0
        %417 = vmatpush1.msra.mxu0 0.0
        %418 = vmatprep.subr.mxu0 0.0
        %419 = vmatpush1.msra.mxu0 0.0
        %420 = vmatprep.subr.mxu0 0.0
        %421 = vmatpush1.msra.mxu0 0.0
        %422 = vmatprep.subr.mxu0 0.0
        %423 = vmatpush1.msra.mxu0 0.0
        %424 = vmatprep.subr.mxu0 0.0
        %425 = vmatpush1.msra.mxu0 0.0
        %426 = vmatprep.subr.mxu0 0.0
        %427 = vmatpush1.msra.mxu0 0.0
        %428 = vmatprep.subr.mxu0 0.0
        %429 = vmatpush1.msra.mxu0 0.0
        %430 = vmatprep.subr.mxu0 0.0
        %431 = vmatpush1.msra.mxu0 0.0
        %432 = vmatprep.subr.mxu0 0.0
        %433 = vmatpush1.msra.mxu0 0.0
        %434 = vmatprep.subr.mxu0 0.0
        %435 = vmatpush1.msra.mxu0 0.0
        %436 = vmatprep.subr.mxu0 0.0
        %437 = vmatpush1.msra.mxu0 0.0
        %438 = vmatprep.subr.mxu0 0.0
        %439 = vmatpush1.msra.mxu0 0.0
        %440 = vmatprep.subr.mxu0 0.0
        %441 = vmatpush1.msra.mxu0 0.0
        %442 = vmatprep.subr.mxu0 0.0
        %443 = vmatpush1.msra.mxu0 0.0
        %444 = vmatprep.subr.mxu0 0.0
        %445 = vmatpush1.msra.mxu0 0.0
        %446 = vmatprep.mubr.f32.mxu0 0.0
        %447 = vmatmul.mubr.f32.gmra.mrb[0].mxu0 %v380
        %v448 = vpop.f32.mrb[0].mxu0
        %v449 = vadd.f32 %v377, %v448
        %v450 = vpop.f32.mrb[0].mxu0
        %451 = vdwg.mxu0
        %v452 = vld [vmem:[%s310] sm:$0x1]
        %vm453 = vcmp.gt.s32.totalorder %v452, 0
        %v454 = vsel %vm453, 0.0, -1e+09
        %456 = vrot.lane.b32.xlu0 %v449, 96
        %v457 = vpop.permute.xlu0 %456
        %v458 = vsel %vm378, %v449, 0
        %v460 = vsel %vm378, %v457, 0
        %462 = vmatprep.subr.mxu0 0.0
        %463 = vmatpush1.xpose.msra.mxu0 %v460
        %464 = vmatprep.subr.mxu0 0.0
        %465 = vmatpush1.xpose.msra.mxu0 0.0
        %466 = vmatprep.subr.mxu0 0.0
        %467 = vmatpush1.xpose.msra.mxu0 0.0
        %468 = vmatprep.subr.mxu0 0.0
        %469 = vmatpush1.xpose.msra.mxu0 0.0
        %470 = vmatprep.subr.mxu0 0.0
        %471 = vmatpush1.xpose.msra.mxu0 0.0
        %472 = vmatprep.subr.mxu0 0.0
        %473 = vmatpush1.xpose.msra.mxu0 0.0
        %474 = vmatprep.subr.mxu0 0.0
        %475 = vmatpush1.xpose.msra.mxu0 0.0
        %476 = vmatprep.subr.mxu0 0.0
        %477 = vmatpush1.xpose.msra.mxu0 0.0
        %478 = vmatprep.subr.mxu0 0.0
        %479 = vmatpush1.xpose.msra.mxu0 0.0
        %480 = vmatprep.subr.mxu0 0.0
        %481 = vmatpush1.xpose.msra.mxu0 0.0
        %482 = vmatprep.subr.mxu0 0.0
        %483 = vmatpush1.xpose.msra.mxu0 0.0
        %484 = vmatprep.subr.mxu0 0.0
        %485 = vmatpush1.xpose.msra.mxu0 0.0
        %486 = vmatprep.subr.mxu0 0.0
        %487 = vmatpush1.xpose.msra.mxu0 0.0
        %488 = vmatprep.subr.mxu0 0.0
        %489 = vmatpush1.xpose.msra.mxu0 0.0
        %490 = vmatprep.subr.mxu0 0.0
        %491 = vmatpush1.xpose.msra.mxu0 0.0
        %492 = vmatprep.subr.mxu0 0.0
        %493 = vmatpush1.xpose.msra.mxu0 0.0
        %494 = vmatprep.subr.mxu0 0.0
        %495 = vmatpush1.xpose.msra.mxu0 0.0
        %496 = vmatprep.subr.mxu0 0.0
        %497 = vmatpush1.xpose.msra.mxu0 0.0
        %498 = vmatprep.subr.mxu0 0.0
        %499 = vmatpush1.xpose.msra.mxu0 0.0
        %500 = vmatprep.subr.mxu0 0.0
        %501 = vmatpush1.xpose.msra.mxu0 0.0
        %502 = vmatprep.subr.mxu0 0.0
        %503 = vmatpush1.xpose.msra.mxu0 0.0
        %504 = vmatprep.subr.mxu0 0.0
        %505 = vmatpush1.xpose.msra.mxu0 0.0
        %506 = vmatprep.subr.mxu0 0.0
        %507 = vmatpush1.xpose.msra.mxu0 0.0
        %508 = vmatprep.subr.mxu0 0.0
        %509 = vmatpush1.xpose.msra.mxu0 0.0
        %510 = vmatprep.subr.mxu0 0.0
        %511 = vmatpush1.xpose.msra.mxu0 0.0
        %512 = vmatprep.subr.mxu0 0.0
        %513 = vmatpush1.xpose.msra.mxu0 0.0
        %514 = vmatprep.subr.mxu0 0.0
        %515 = vmatpush1.xpose.msra.mxu0 0.0
        %516 = vmatprep.subr.mxu0 0.0
        %517 = vmatpush1.xpose.msra.mxu0 0.0
        %518 = vmatprep.subr.mxu0 0.0
        %519 = vmatpush1.xpose.msra.mxu0 0.0
        %520 = vmatprep.subr.mxu0 0.0
        %521 = vmatpush1.xpose.msra.mxu0 0.0
        %522 = vmatprep.subr.mxu0 0.0
        %523 = vmatpush1.xpose.msra.mxu0 0.0
        %524 = vmatprep.subr.mxu0 0.0
        %525 = vmatpush1.xpose.msra.mxu0 0.0
        %526 = vmatprep.mubr.f32.mxu0 0.0
        %527 = vmatmul.mubr.f32.gmra.mrb[0].mxu0 %v458
        %v528 = vpop.f32.mrb[0].mxu0
        %v529 = vadd.f32 0.0, %v528
        %v530 = vpop.f32.mrb[0].mxu0
        %531 = vdwg.mxu0
        %v532 = vmul.f32 %v529, 0.17677669
        %v534 = vlaneseq
        %v535 = vshrl.u32 %v534, 7
        %v536 = vsub.s32 0, %v535
        %v537 = vrot.slane %v454, %v536
        %v539 = vadd.f32 %v532, %v537
        %vm540 = vcmask 64512
        %v541 = vsel %vm540, %v539, -inf
        %542 = vmax.xlane.f32.xlu0 %v541
        %v543 = vpop.xlane.xlu0 %542
        %v544 = vsub.f32 %v539, %v543
        %v545 = vmul.f32 %v544, 1.442695
        %v546 = vpow.pop %v545
        %v547 = vsel %vm540, %v546, 0.0
        %548 = vadd.xlane.f32.xlu0 %v547
        %v549 = vpop.xlane.xlu0 %548
        %v550 = vrcp.pop %v549
        %v551 = vmul.f32 %v546, %v550
        %552 = vrot.lane.b32.xlu0 %v449, 64
        %v553 = vpop.permute.xlu0 %552
        %v556 = vsel %vm540, %v551, 0
        %558 = vmatprep.subr.mxu0 0.0
        %559 = vmatpush1.msra.mxu0 %v553
        %560 = vmatprep.subr.mxu0 0.0
        %561 = vmatpush1.msra.mxu0 0.0
        %562 = vmatprep.subr.mxu0 0.0
        %563 = vmatpush1.msra.mxu0 0.0
        %564 = vmatprep.subr.mxu0 0.0
        %565 = vmatpush1.msra.mxu0 0.0
        %566 = vmatprep.subr.mxu0 0.0
        %567 = vmatpush1.msra.mxu0 0.0
        %568 = vmatprep.subr.mxu0 0.0
        %569 = vmatpush1.msra.mxu0 0.0
        %570 = vmatprep.subr.mxu0 0.0
        %571 = vmatpush1.msra.mxu0 0.0
        %572 = vmatprep.subr.mxu0 0.0
        %573 = vmatpush1.msra.mxu0 0.0
        %574 = vmatprep.subr.mxu0 0.0
        %575 = vmatpush1.msra.mxu0 0.0
        %576 = vmatprep.subr.mxu0 0.0
        %577 = vmatpush1.msra.mxu0 0.0
        %578 = vmatprep.subr.mxu0 0.0
        %579 = vmatpush1.msra.mxu0 0.0
        %580 = vmatprep.subr.mxu0 0.0
        %581 = vmatpush1.msra.mxu0 0.0
        %582 = vmatprep.subr.mxu0 0.0
        %583 = vmatpush1.msra.mxu0 0.0
        %584 = vmatprep.subr.mxu0 0.0
        %585 = vmatpush1.msra.mxu0 0.0
        %586 = vmatprep.subr.mxu0 0.0
        %587 = vmatpush1.msra.mxu0 0.0
        %588 = vmatprep.subr.mxu0 0.0
        %589 = vmatpush1.msra.mxu0 0.0
        %590 = vmatprep.subr.mxu0 0.0
        %591 = vmatpush1.msra.mxu0 0.0
        %592 = vmatprep.subr.mxu0 0.0
        %593 = vmatpush1.msra.mxu0 0.0
        %594 = vmatprep.subr.mxu0 0.0
        %595 = vmatpush1.msra.mxu0 0.0
        %596 = vmatprep.subr.mxu0 0.0
        %597 = vmatpush1.msra.mxu0 0.0
        %598 = vmatprep.subr.mxu0 0.0
        %599 = vmatpush1.msra.mxu0 0.0
        %600 = vmatprep.subr.mxu0 0.0
        %601 = vmatpush1.msra.mxu0 0.0
        %602 = vmatprep.subr.mxu0 0.0
        %603 = vmatpush1.msra.mxu0 0.0
        %604 = vmatprep.subr.mxu0 0.0
        %605 = vmatpush1.msra.mxu0 0.0
        %606 = vmatprep.subr.mxu0 0.0
        %607 = vmatpush1.msra.mxu0 0.0
        %608 = vmatprep.subr.mxu0 0.0
        %609 = vmatpush1.msra.mxu0 0.0
        %610 = vmatprep.subr.mxu0 0.0
        %611 = vmatpush1.msra.mxu0 0.0
        %612 = vmatprep.subr.mxu0 0.0
        %613 = vmatpush1.msra.mxu0 0.0
        %614 = vmatprep.subr.mxu0 0.0
        %615 = vmatpush1.msra.mxu0 0.0
        %616 = vmatprep.subr.mxu0 0.0
        %617 = vmatpush1.msra.mxu0 0.0
        %618 = vmatprep.subr.mxu0 0.0
        %619 = vmatpush1.msra.mxu0 0.0
        %620 = vmatprep.subr.mxu0 0.0
        %621 = vmatpush1.msra.mxu0 0.0
        %622 = vmatprep.mubr.f32.mxu0 0.0
        %623 = vmatmul.mubr.f32.gmra.mrb[0].mxu0 %v556
        %v624 = vpop.f32.mrb[0].mxu0
        %v625 = vadd.f32 0.0, %v624
        %v626 = vpop.f32.mrb[0].mxu0
        %627 = vdwg.mxu0
        %v628 = vld [vmem:[%s4 + $0x8] sm:$0xff]
        %v629 = vld [vmem:[%s4 + $0x28] sm:$0xff]
        %v630 = vld [vmem:[%s4 + $0x48] sm:$0xff]
        %v631 = vld [vmem:[%s4 + $0x68] sm:$0xff]
        %v632 = vld [vmem:[%s7 + $0x1] ss:$0 sm:$0xff]
        %v634 = vsel %vm378, %v625, 0
        %636 = vmatprep.subr.mxu0 0.0
        %637 = vmatpush1.msra.mxu0 %v628
        %638 = vmatprep.subr.mxu0 0.0
        %639 = vmatpush1.msra.mxu0 %v629
        %640 = vmatprep.subr.mxu0 0.0
        %641 = vmatpush1.msra.mxu0 %v630
        %642 = vmatprep.subr.mxu0 0.0
        %643 = vmatpush1.msra.mxu0 %v631
        %644 = vmatprep.subr.mxu0 0.0
        %645 = vmatpush1.msra.mxu0 0.0
        %646 = vmatprep.subr.mxu0 0.0
        %647 = vmatpush1.msra.mxu0 0.0
        %648 = vmatprep.subr.mxu0 0.0
        %649 = vmatpush1.msra.mxu0 0.0
        %650 = vmatprep.subr.mxu0 0.0
        %651 = vmatpush1.msra.mxu0 0.0
        %652 = vmatprep.subr.mxu0 0.0
        %653 = vmatpush1.msra.mxu0 0.0
        %654 = vmatprep.subr.mxu0 0.0
        %655 = vmatpush1.msra.mxu0 0.0
        %656 = vmatprep.subr.mxu0 0.0
        %657 = vmatpush1.msra.mxu0 0.0
        %658 = vmatprep.subr.mxu0 0.0
        %659 = vmatpush1.msra.mxu0 0.0
        %660 = vmatprep.subr.mxu0 0.0
        %661 = vmatpush1.msra.mxu0 0.0
        %662 = vmatprep.subr.mxu0 0.0
        %663 = vmatpush1.msra.mxu0 0.0
        %664 = vmatprep.subr.mxu0 0.0
        %665 = vmatpush1.msra.mxu0 0.0
        %666 = vmatprep.subr.mxu0 0.0
        %667 = vmatpush1.msra.mxu0 0.0
        %668 = vmatprep.subr.mxu0 0.0
        %669 = vmatpush1.msra.mxu0 0.0
        %670 = vmatprep.subr.mxu0 0.0
        %671 = vmatpush1.msra.mxu0 0.0
        %672 = vmatprep.subr.mxu0 0.0
        %673 = vmatpush1.msra.mxu0 0.0
        %674 = vmatprep.subr.mxu0 0.0
        %675 = vmatpush1.msra.mxu0 0.0
        %676 = vmatprep.subr.mxu0 0.0
        %677 = vmatpush1.msra.mxu0 0.0
        %678 = vmatprep.subr.mxu0 0.0
        %679 = vmatpush1.msra.mxu0 0.0
        %680 = vmatprep.subr.mxu0 0.0
        %681 = vmatpush1.msra.mxu0 0.0
        %682 = vmatprep.subr.mxu0 0.0
        %683 = vmatpush1.msra.mxu0 0.0
        %684 = vmatprep.subr.mxu0 0.0
        %685 = vmatpush1.msra.mxu0 0.0
        %686 = vmatprep.subr.mxu0 0.0
        %687 = vmatpush1.msra.mxu0 0.0
        %688 = vmatprep.subr.mxu0 0.0
        %689 = vmatpush1.msra.mxu0 0.0
        %690 = vmatprep.subr.mxu0 0.0
        %691 = vmatpush1.msra.mxu0 0.0
        %692 = vmatprep.subr.mxu0 0.0
        %693 = vmatpush1.msra.mxu0 0.0
        %694 = vmatprep.subr.mxu0 0.0
        %695 = vmatpush1.msra.mxu0 0.0
        %696 = vmatprep.subr.mxu0 0.0
        %697 = vmatpush1.msra.mxu0 0.0
        %698 = vmatprep.subr.mxu0 0.0
        %699 = vmatpush1.msra.mxu0 0.0
        %700 = vmatprep.mubr.f32.mxu0 0.0
        %701 = vmatmul.mubr.f32.gmra.mrb[0].mxu0 %v634
        %v702 = vpop.f32.mrb[0].mxu0
        %v703 = vadd.f32 %v632, %v702
        %v704 = vpop.f32.mrb[0].mxu0
        %705 = vdwg.mxu0
        %v706 = vadd.f32 %v372, %v703
        %v707 = vld [vmem:[%s7 + $0x2] ss:$0 sm:$0xff]
        %v708 = vld [vmem:[%s7 + $0x3] ss:$0 sm:$0xff]
        %v709 = vsel %vm378, %v706, 0.0
        %710 = vadd.xlane.f32.xlu0 %v709
        %v711 = vpop.xlane.xlu0 %710
        %v712 = vrcp.pop 32.0
        %v713 = vmul.f32 %v711, %v712
        %v714 = vsub.f32 %v706, %v713
        %v715 = vmul.f32 %v714, %v714
        %v716 = vsel %vm378, %v715, 0.0
        %717 = vadd.xlane.f32.xlu0 %v716
        %v718 = vpop.xlane.xlu0 %717
        %v719 = vmul.f32 %v718, %v712
        %v720 = vadd.f32 %v719, 1e-05
        %v721 = vrsqrt.pop %v720
        %v722 = vmul.f32 %v714, %v721
        %v723 = vmul.f32 %v722, %v707
        %v724 = vadd.f32 %v723, %v708
        %v725 = vld [vmem:[%s4 + $0x10] sm:$0xff]
        %v726 = vld [vmem:[%s4 + $0x30] sm:$0xff]
        %v727 = vld [vmem:[%s4 + $0x50] sm:$0xff]
        %v728 = vld [vmem:[%s4 + $0x70] sm:$0xff]
        %v729 = vld [vmem:[%s7 + $0x4] ss:$0 sm:$0xff]
        %v731 = vsel %vm378, %v724, 0
        %733 = vmatprep.subr.mxu0 0.0
        %734 = vmatpush1.msra.mxu0 %v725
        %735 = vmatprep.subr.mxu0 0.0
        %736 = vmatpush1.msra.mxu0 %v726
        %737 = vmatprep.subr.mxu0 0.0
        %738 = vmatpush1.msra.mxu0 %v727
        %739 = vmatprep.subr.mxu0 0.0
        %740 = vmatpush1.msra.mxu0 %v728
        %741 = vmatprep.subr.mxu0 0.0
        %742 = vmatpush1.msra.mxu0 0.0
        %743 = vmatprep.subr.mxu0 0.0
        %744 = vmatpush1.msra.mxu0 0.0
        %745 = vmatprep.subr.mxu0 0.0
        %746 = vmatpush1.msra.mxu0 0.0
        %747 = vmatprep.subr.mxu0 0.0
        %748 = vmatpush1.msra.mxu0 0.0
        %749 = vmatprep.subr.mxu0 0.0
        %750 = vmatpush1.msra.mxu0 0.0
        %751 = vmatprep.subr.mxu0 0.0
        %752 = vmatpush1.msra.mxu0 0.0
        %753 = vmatprep.subr.mxu0 0.0
        %754 = vmatpush1.msra.mxu0 0.0
        %755 = vmatprep.subr.mxu0 0.0
        %756 = vmatpush1.msra.mxu0 0.0
        %757 = vmatprep.subr.mxu0 0.0
        %758 = vmatpush1.msra.mxu0 0.0
        %759 = vmatprep.subr.mxu0 0.0
        %760 = vmatpush1.msra.mxu0 0.0
        %761 = vmatprep.subr.mxu0 0.0
        %762 = vmatpush1.msra.mxu0 0.0
        %763 = vmatprep.subr.mxu0 0.0
        %764 = vmatpush1.msra.mxu0 0.0
        %765 = vmatprep.subr.mxu0 0.0
        %766 = vmatpush1.msra.mxu0 0.0
        %767 = vmatprep.subr.mxu0 0.0
        %768 = vmatpush1.msra.mxu0 0.0
        %769 = vmatprep.subr.mxu0 0.0
        %770 = vmatpush1.msra.mxu0 0.0
        %771 = vmatprep.subr.mxu0 0.0
        %772 = vmatpush1.msra.mxu0 0.0
        %773 = vmatprep.subr.mxu0 0.0
        %774 = vmatpush1.msra.mxu0 0.0
        %775 = vmatprep.subr.mxu0 0.0
        %776 = vmatpush1.msra.mxu0 0.0
        %777 = vmatprep.subr.mxu0 0.0
        %778 = vmatpush1.msra.mxu0 0.0
        %779 = vmatprep.subr.mxu0 0.0
        %780 = vmatpush1.msra.mxu0 0.0
        %781 = vmatprep.subr.mxu0 0.0
        %782 = vmatpush1.msra.mxu0 0.0
        %783 = vmatprep.subr.mxu0 0.0
        %784 = vmatpush1.msra.mxu0 0.0
        %785 = vmatprep.subr.mxu0 0.0
        %786 = vmatpush1.msra.mxu0 0.0
        %787 = vmatprep.subr.mxu0 0.0
        %788 = vmatpush1.msra.mxu0 0.0
        %789 = vmatprep.subr.mxu0 0.0
        %790 = vmatpush1.msra.mxu0 0.0
        %791 = vmatprep.subr.mxu0 0.0
        %792 = vmatpush1.msra.mxu0 0.0
        %793 = vmatprep.subr.mxu0 0.0
        %794 = vmatpush1.msra.mxu0 0.0
        %795 = vmatprep.subr.mxu0 0.0
        %796 = vmatpush1.msra.mxu0 0.0
        %797 = vmatprep.mubr.f32.mxu0 0.0
        %798 = vmatmul.mubr.f32.gmra.mrb[0].mxu0 %v731
        %v799 = vpop.f32.mrb[0].mxu0
        %v800 = vadd.f32 %v729, %v799
        %v801 = vpop.f32.mrb[0].mxu0
        %802 = vdwg.mxu0
        %v803 = vmul.f32 %v800, %v800
        %v804 = vmul.f32 %v800, %v803
        %v805 = vmul.f32 %v804, 0.044715
        %v806 = vadd.f32 %v800, %v805
        %v807 = vmul.f32 %v806, 0.7978846
        %v808 = vtanh.pop %v807
        %v809 = vadd.f32 %v808, 1.0
        %v810 = vmul.f32 %v809, 0.5
        %v811 = vmul.f32 %v800, %v810
        %v812 = vld [vmem:[%s5] sm:$0xff]
        %v813 = vld [vmem:[%s5 + $0x8] sm:$0xff]
        %v814 = vld [vmem:[%s5 + $0x10] sm:$0xff]
        %v815 = vld [vmem:[%s5 + $0x18] sm:$0xff]
        %v816 = vld [vmem:[%s5 + $0x20] sm:$0xff]
        %v817 = vld [vmem:[%s5 + $0x28] sm:$0xff]
        %v818 = vld [vmem:[%s5 + $0x30] sm:$0xff]
        %v819 = vld [vmem:[%s5 + $0x38] sm:$0xff]
        %v820 = vld [vmem:[%s7 + $0x5] ss:$0 sm:$0xff]
        %vm821 = vcmask 523264
        %v823 = vsel %vm821, %v811, 0
        %825 = vmatprep.subr.mxu0 0.0
        %826 = vmatpush1.msra.mxu0 %v812
        %827 = vmatprep.subr.mxu0 0.0
        %828 = vmatpush1.msra.mxu0 %v813
        %829 = vmatprep.subr.mxu0 0.0
        %830 = vmatpush1.msra.mxu0 %v814
        %831 = vmatprep.subr.mxu0 0.0
        %832 = vmatpush1.msra.mxu0 %v815
        %833 = vmatprep.subr.mxu0 0.0
        %834 = vmatpush1.msra.mxu0 %v816
        %835 = vmatprep.subr.mxu0 0.0
        %836 = vmatpush1.msra.mxu0 %v817
        %837 = vmatprep.subr.mxu0 0.0
        %838 = vmatpush1.msra.mxu0 %v818
        %839 = vmatprep.subr.mxu0 0.0
        %840 = vmatpush1.msra.mxu0 %v819
        %841 = vmatprep.subr.mxu0 0.0
        %842 = vmatpush1.msra.mxu0 0.0
        %843 = vmatprep.subr.mxu0 0.0
        %844 = vmatpush1.msra.mxu0 0.0
        %845 = vmatprep.subr.mxu0 0.0
        %846 = vmatpush1.msra.mxu0 0.0
        %847 = vmatprep.subr.mxu0 0.0
        %848 = vmatpush1.msra.mxu0 0.0
        %849 = vmatprep.subr.mxu0 0.0
        %850 = vmatpush1.msra.mxu0 0.0
        %851 = vmatprep.subr.mxu0 0.0
        %852 = vmatpush1.msra.mxu0 0.0
        %853 = vmatprep.subr.mxu0 0.0
        %854 = vmatpush1.msra.mxu0 0.0
        %855 = vmatprep.subr.mxu0 0.0
        %856 = vmatpush1.msra.mxu0 0.0
        %857 = vmatprep.subr.mxu0 0.0
        %858 = vmatpush1.msra.mxu0 0.0
        %859 = vmatprep.subr.mxu0 0.0
        %860 = vmatpush1.msra.mxu0 0.0
        %861 = vmatprep.subr.mxu0 0.0
        %862 = vmatpush1.msra.mxu0 0.0
        %863 = vmatprep.subr.mxu0 0.0
        %864 = vmatpush1.msra.mxu0 0.0
        %865 = vmatprep.subr.mxu0 0.0
        %866 = vmatpush1.msra.mxu0 0.0
        %867 = vmatprep.subr.mxu0 0.0
        %868 = vmatpush1.msra.mxu0 0.0
        %869 = vmatprep.subr.mxu0 0.0
        %870 = vmatpush1.msra.mxu0 0.0
        %871 = vmatprep.subr.mxu0 0.0
        %872 = vmatpush1.msra.mxu0 0.0
        %873 = vmatprep.subr.mxu0 0.0
        %874 = vmatpush1.msra.mxu0 0.0
        %875 = vmatprep.subr.mxu0 0.0
        %876 = vmatpush1.msra.mxu0 0.0
        %877 = vmatprep.subr.mxu0 0.0
        %878 = vmatpush1.msra.mxu0 0.0
        %879 = vmatprep.subr.mxu0 0.0
        %880 = vmatpush1.msra.mxu0 0.0
        %881 = vmatprep.subr.mxu0 0.0
        %882 = vmatpush1.msra.mxu0 0.0
        %883 = vmatprep.subr.mxu0 0.0
        %884 = vmatpush1.msra.mxu0 0.0
        %885 = vmatprep.subr.mxu0 0.0
        %886 = vmatpush1.msra.mxu0 0.0
        %887 = vmatprep.subr.mxu0 0.0
        %888 = vmatpush1.msra.mxu0 0.0
        %889 = vmatprep.mubr.f32.mxu0 0.0
        %890 = vmatmul.mubr.f32.gmra.mrb[0].mxu0 %v823
        %v891 = vpop.f32.mrb[0].mxu0
        %v892 = vadd.f32 %v820, %v891
        %v893 = vpop.f32.mrb[0].mxu0
        %894 = vdwg.mxu0
        %v895 = vadd.f32 %v724, %v892
        %v896 = vld [vmem:[%s7 + $0x6] ss:$0 sm:$0xff]
        %v897 = vld [vmem:[%s7 + $0x7] ss:$0 sm:$0xff]
        %v898 = vsel %vm378, %v895, 0.0
        %899 = vadd.xlane.f32.xlu0 %v898
        %v900 = vpop.xlane.xlu0 %899
        %v901 = vmul.f32 %v900, %v712
        %v902 = vsub.f32 %v895, %v901
        %v903 = vmul.f32 %v902, %v902
        %v904 = vsel %vm378, %v903, 0.0
        %905 = vadd.xlane.f32.xlu0 %v904
        %v906 = vpop.xlane.xlu0 %905
        %v907 = vmul.f32 %v906, %v712
        %v908 = vadd.f32 %v907, 1e-05
        %v909 = vrsqrt.pop %v908
        %v910 = vmul.f32 %v902, %v909
        %v911 = vmul.f32 %v910, %v896
        %v912 = vadd.f32 %v911, %v897
        %v913 = vld [vmem:[%s4 + $0x18] sm:$0xff]
        %v914 = vld [vmem:[%s4 + $0x38] sm:$0xff]
        %v915 = vld [vmem:[%s4 + $0x58] sm:$0xff]
        %v916 = vld [vmem:[%s4 + $0x78] sm:$0xff]
        %v917 = vld [vmem:[%s7 + $0x10] ss:$0 sm:$0xff]
        %v919 = vsel %vm378, %v912, 0
        %921 = vmatprep.subr.mxu0 0.0
        %922 = vmatpush1.msra.mxu0 %v913
        %923 = vmatprep.subr.mxu0 0.0
        %924 = vmatpush1.msra.mxu0 %v914
        %925 = vmatprep.subr.mxu0 0.0
        %926 = vmatpush1.msra.mxu0 %v915
        %927 = vmatprep.subr.mxu0 0.0
        %928 = vmatpush1.msra.mxu0 %v916
        %929 = vmatprep.subr.mxu0 0.0
        %930 = vmatpush1.msra.mxu0 0.0
        %931 = vmatprep.subr.mxu0 0.0
        %932 = vmatpush1.msra.mxu0 0.0
        %933 = vmatprep.subr.mxu0 0.0
        %934 = vmatpush1.msra.mxu0 0.0
        %935 = vmatprep.subr.mxu0 0.0
        %936 = vmatpush1.msra.mxu0 0.0
        %937 = vmatprep.subr.mxu0 0.0
        %938 = vmatpush1.msra.mxu0 0.0
        %939 = vmatprep.subr.mxu0 0.0
        %940 = vmatpush1.msra.mxu0 0.0
        %941 = vmatprep.subr.mxu0 0.0
        %942 = vmatpush1.msra.mxu0 0.0
        %943 = vmatprep.subr.mxu0 0.0
        %944 = vmatpush1.msra.mxu0 0.0
        %945 = vmatprep.subr.mxu0 0.0
        %946 = vmatpush1.msra.mxu0 0.0
        %947 = vmatprep.subr.mxu0 0.0
        %948 = vmatpush1.msra.mxu0 0.0
        %949 = vmatprep.subr.mxu0 0.0
        %950 = vmatpush1.msra.mxu0 0.0
        %951 = vmatprep.subr.mxu0 0.0
        %952 = vmatpush1.msra.mxu0 0.0
        %953 = vmatprep.subr.mxu0 0.0
        %954 = vmatpush1.msra.mxu0 0.0
        %955 = vmatprep.subr.mxu0 0.0
        %956 = vmatpush1.msra.mxu0 0.0
        %957 = vmatprep.subr.mxu0 0.0
        %958 = vmatpush1.msra.mxu0 0.0
        %959 = vmatprep.subr.mxu0 0.0
        %960 = vmatpush1.msra.mxu0 0.0
        %961 = vmatprep.subr.mxu0 0.0
        %962 = vmatpush1.msra.mxu0 0.0
        %963 = vmatprep.subr.mxu0 0.0
        %964 = vmatpush1.msra.mxu0 0.0
        %965 = vmatprep.subr.mxu0 0.0
        %966 = vmatpush1.msra.mxu0 0.0
        %967 = vmatprep.subr.mxu0 0.0
        %968 = vmatpush1.msra.mxu0 0.0
        %969 = vmatprep.subr.mxu0 0.0
        %970 = vmatpush1.msra.mxu0 0.0
        %971 = vmatprep.subr.mxu0 0.0
        %972 = vmatpush1.msra.mxu0 0.0
        %973 = vmatprep.subr.mxu0 0.0
        %974 = vmatpush1.msra.mxu0 0.0
        %975 = vmatprep.subr.mxu0 0.0
        %976 = vmatpush1.msra.mxu0 0.0
        %977 = vmatprep.subr.mxu0 0.0
        %978 = vmatpush1.msra.mxu0 0.0
        %979 = vmatprep.subr.mxu0 0.0
        %980 = vmatpush1.msra.mxu0 0.0
        %981 = vmatprep.subr.mxu0 0.0
        %982 = vmatpush1.msra.mxu0 0.0
        %983 = vmatprep.subr.mxu0 0.0
        %984 = vmatpush1.msra.mxu0 0.0
        %985 = vmatprep.mubr.f32.mxu0 0.0
        %986 = vmatmul.mubr.f32.gmra.mrb[0].mxu0 %v919
        %v987 = vpop.f32.mrb[0].mxu0
        %v988 = vadd.f32 %v917, %v987
        %v989 = vpop.f32.mrb[0].mxu0
        %990 = vdwg.mxu0
        %v991 = vtanh.pop %v988
        %v992 = vld [vmem:[%s6] sm:$0xff]
        %v993 = vld [vmem:[%s6 + $0x10] sm:$0xff]
        %v994 = vld [vmem:[%s6 + $0x20] sm:$0xff]
        %v995 = vld [vmem:[%s6 + $0x30] sm:$0xff]
        %v996 = vld [vmem:[%s7 + $0x11] ss:$0 sm:$0xff]
        %v998 = vsel %vm378, %v991, 0
        %1000 = vmatprep.subr.mxu0 0.0
        %1001 = vmatpush1.msra.mxu0 %v992
        %1002 = vmatprep.subr.mxu0 0.0
        %1003 = vmatpush1.msra.mxu0 %v993
        %1004 = vmatprep.subr.mxu0 0.0
        %1005 = vmatpush1.msra.mxu0 %v994
        %1006 = vmatprep.subr.mxu0 0.0
        %1007 = vmatpush1.msra.mxu0 %v995
        %1008 = vmatprep.subr.mxu0 0.0
        %1009 = vmatpush1.msra.mxu0 0.0
        %1010 = vmatprep.subr.mxu0 0.0
        %1011 = vmatpush1.msra.mxu0 0.0
        %1012 = vmatprep.subr.mxu0 0.0
        %1013 = vmatpush1.msra.mxu0 0.0
        %1014 = vmatprep.subr.mxu0 0.0
        %1015 = vmatpush1.msra.mxu0 0.0
        %1016 = vmatprep.subr.mxu0 0.0
        %1017 = vmatpush1.msra.mxu0 0.0
        %1018 = vmatprep.subr.mxu0 0.0
        %1019 = vmatpush1.msra.mxu0 0.0
        %1020 = vmatprep.subr.mxu0 0.0
        %1021 = vmatpush1.msra.mxu0 0.0
        %1022 = vmatprep.subr.mxu0 0.0
        %1023 = vmatpush1.msra.mxu0 0.0
        %1024 = vmatprep.subr.mxu0 0.0
        %1025 = vmatpush1.msra.mxu0 0.0
        %1026 = vmatprep.subr.mxu0 0.0
        %1027 = vmatpush1.msra.mxu0 0.0
        %1028 = vmatprep.subr.mxu0 0.0
        %1029 = vmatpush1.msra.mxu0 0.0
        %1030 = vmatprep.subr.mxu0 0.0
        %1031 = vmatpush1.msra.mxu0 0.0
        %1032 = vmatprep.subr.mxu0 0.0
        %1033 = vmatpush1.msra.mxu0 0.0
        %1034 = vmatprep.subr.mxu0 0.0
        %1035 = vmatpush1.msra.mxu0 0.0
        %1036 = vmatprep.subr.mxu0 0.0
        %1037 = vmatpush1.msra.mxu0 0.0
        %1038 = vmatprep.subr.mxu0 0.0
        %1039 = vmatpush1.msra.mxu0 0.0
        %1040 = vmatprep.subr.mxu0 0.0
        %1041 = vmatpush1.msra.mxu0 0.0
        %1042 = vmatprep.subr.mxu0 0.0
        %1043 = vmatpush1.msra.mxu0 0.0
        %1044 = vmatprep.subr.mxu0 0.0
        %1045 = vmatpush1.msra.mxu0 0.0
        %1046 = vmatprep.subr.mxu0 0.0
        %1047 = vmatpush1.msra.mxu0 0.0
        %1048 = vmatprep.subr.mxu0 0.0
        %1049 = vmatpush1.msra.mxu0 0.0
        %1050 = vmatprep.subr.mxu0 0.0
        %1051 = vmatpush1.msra.mxu0 0.0
        %1052 = vmatprep.subr.mxu0 0.0
        %1053 = vmatpush1.msra.mxu0 0.0
        %1054 = vmatprep.subr.mxu0 0.0
        %1055 = vmatpush1.msra.mxu0 0.0
        %1056 = vmatprep.subr.mxu0 0.0
        %1057 = vmatpush1.msra.mxu0 0.0
        %1058 = vmatprep.subr.mxu0 0.0
        %1059 = vmatpush1.msra.mxu0 0.0
        %1060 = vmatprep.subr.mxu0 0.0
        %1061 = vmatpush1.msra.mxu0 0.0
        %1062 = vmatprep.subr.mxu0 0.0
        %1063 = vmatpush1.msra.mxu0 0.0
        %1064 = vmatprep.mubr.f32.mxu0 0.0
        %1065 = vmatmul.mubr.f32.gmra.mrb[0].mxu0 %v998
        %v1066 = vpop.f32.mrb[0].mxu0
        %v1067 = vadd.f32 %v996, %v1066
        %v1068 = vpop.f32.mrb[0].mxu0
        %1069 = vdwg.mxu0
        %1070 = vst [vmem:[%s301] sm:$0x1] %v1067
        %v1071 = vld [vmem:[%s6 + $0x8] sm:$0xff]
        %v1072 = vld [vmem:[%s6 + $0x18] sm:$0xff]
        %v1073 = vld [vmem:[%s6 + $0x28] sm:$0xff]
        %v1074 = vld [vmem:[%s6 + $0x38] sm:$0xff]
        %v1075 = vld [vmem:[%s7 + $0x12] ss:$0 sm:$0xff]
        %1076 = vmatprep.subr.mxu0 0.0
        %1077 = vmatpush1.msra.mxu0 %v1071
        %1078 = vmatprep.subr.mxu0 0.0
        %1079 = vmatpush1.msra.mxu0 %v1072
        %1080 = vmatprep.subr.mxu0 0.0
        %1081 = vmatpush1.msra.mxu0 %v1073
        %1082 = vmatprep.subr.mxu0 0.0
        %1083 = vmatpush1.msra.mxu0 %v1074
        %1084 = vmatprep.subr.mxu0 0.0
        %1085 = vmatpush1.msra.mxu0 0.0
        %1086 = vmatprep.subr.mxu0 0.0
        %1087 = vmatpush1.msra.mxu0 0.0
        %1088 = vmatprep.subr.mxu0 0.0
        %1089 = vmatpush1.msra.mxu0 0.0
        %1090 = vmatprep.subr.mxu0 0.0
        %1091 = vmatpush1.msra.mxu0 0.0
        %1092 = vmatprep.subr.mxu0 0.0
        %1093 = vmatpush1.msra.mxu0 0.0
        %1094 = vmatprep.subr.mxu0 0.0
        %1095 = vmatpush1.msra.mxu0 0.0
        %1096 = vmatprep.subr.mxu0 0.0
        %1097 = vmatpush1.msra.mxu0 0.0
        %1098 = vmatprep.subr.mxu0 0.0
        %1099 = vmatpush1.msra.mxu0 0.0
        %1100 = vmatprep.subr.mxu0 0.0
        %1101 = vmatpush1.msra.mxu0 0.0
        %1102 = vmatprep.subr.mxu0 0.0
        %1103 = vmatpush1.msra.mxu0 0.0
        %1104 = vmatprep.subr.mxu0 0.0
        %1105 = vmatpush1.msra.mxu0 0.0
        %1106 = vmatprep.subr.mxu0 0.0
        %1107 = vmatpush1.msra.mxu0 0.0
        %1108 = vmatprep.subr.mxu0 0.0
        %1109 = vmatpush1.msra.mxu0 0.0
        %1110 = vmatprep.subr.mxu0 0.0
        %1111 = vmatpush1.msra.mxu0 0.0
        %1112 = vmatprep.subr.mxu0 0.0
        %1113 = vmatpush1.msra.mxu0 0.0
        %1114 = vmatprep.subr.mxu0 0.0
        %1115 = vmatpush1.msra.mxu0 0.0
        %1116 = vmatprep.subr.mxu0 0.0
        %1117 = vmatpush1.msra.mxu0 0.0
        %1118 = vmatprep.subr.mxu0 0.0
        %1119 = vmatpush1.msra.mxu0 0.0
        %1120 = vmatprep.subr.mxu0 0.0
        %1121 = vmatpush1.msra.mxu0 0.0
        %1122 = vmatprep.subr.mxu0 0.0
        %1123 = vmatpush1.msra.mxu0 0.0
        %1124 = vmatprep.subr.mxu0 0.0
        %1125 = vmatpush1.msra.mxu0 0.0
        %1126 = vmatprep.subr.mxu0 0.0
        %1127 = vmatpush1.msra.mxu0 0.0
        %1128 = vmatprep.subr.mxu0 0.0
        %1129 = vmatpush1.msra.mxu0 0.0
        %1130 = vmatprep.subr.mxu0 0.0
        %1131 = vmatpush1.msra.mxu0 0.0
        %1132 = vmatprep.subr.mxu0 0.0
        %1133 = vmatpush1.msra.mxu0 0.0
        %1134 = vmatprep.subr.mxu0 0.0
        %1135 = vmatpush1.msra.mxu0 0.0
        %1136 = vmatprep.subr.mxu0 0.0
        %1137 = vmatpush1.msra.mxu0 0.0
        %1138 = vmatprep.subr.mxu0 0.0
        %1139 = vmatpush1.msra.mxu0 0.0
        %1140 = vmatprep.mubr.f32.mxu0 0.0
        %1141 = vmatmul.mubr.f32.gmra.mrb[0].mxu0 %v919
        %v1142 = vpop.f32.mrb[0].mxu0
        %v1143 = vadd.f32 %v1075, %v1142
        %v1144 = vpop.f32.mrb[0].mxu0
        %1145 = vdwg.mxu0
        %1146 = vst [vmem:[%s314] sm:$0xff] %v1143
        %s1147 = sand.u32 %s190, 1
        %s1148 = scalar_lea.sflag [#allocation6], %s1147
        %s1149 = sand.u32 %s190, 1
        %s1150 = scalar_lea.vmem [#allocation5], %s1149
        %p1151 = scmp.lt.s32.totalorder %s30, 1
        %s1152 = scalar_select %p1151, %s30, 1
        %s1153 = smul.addr %s1152, 8
        %s1154 = scalar_lea.vmem %s9, %s1153
        // Predicated region
        $region49: #{intent_slot_forward.1} parent=47 // pred_check
          %p1155 = pneg %p200
        $region50: #{intent_slot_forward.1} parent=47 // pred_check_branch
          %1157 = sbr.rel (%p1155) target = $region52
        $region51: #{intent_slot_forward.1} parent=47 // pred_region
          %s1159 = ssub.s32 16, 16
          %1160 = vsyncadd %s1148, %s1159
          %s1161 = smul.addr %s30, 16
          %s1162 = scalar_lea.hbm %s8, %s1161
          %s1164 = sshll.u32 %s1150, 4
          %s1165 = int_to_ptr.vmem [resolvable:$true] %s1164
          %1167 = dma.vmem_to_hbm [thread:$0]  %s1165, 16, %s1162, %s1148
        $region52: #{intent_slot_forward.1} parent=47 // pred_fallthru
          _
        // Predicated region
        $region53: #{intent_slot_forward.1} parent=47 // pred_check
          %p1168 = pneg %p226
        $region54: #{intent_slot_forward.1} parent=47 // pred_check_branch
          %1170 = sbr.rel (%p1168) target = $region56
        $region55: #{intent_slot_forward.1} parent=47 // pred_region
          _
        $region56: #{intent_slot_forward.1} parent=47 // pred_fallthru
          _
      $region48: #{intent_slot_forward.1} parent=5 // pred_fallthru
        _
      %p1171 = scmp.le.s32.totalorder 2, %s25
      // Predicated region
      $region57: #{intent_slot_forward.1} parent=5 // pred_check
        %p1172 = pneg %p1171
      $region58: #{intent_slot_forward.1} parent=5 // pred_check_branch
        %1174 = sbr.rel (%p1172) target = $region60
      $region59: #{intent_slot_forward.1} parent=5 // pred_region
        %s1175 = ssub.s32 %s25, 2
        // Predicated region
        $region61: #{intent_slot_forward.1} parent=59 // pred_check
          %p1176 = pneg %p206
        $region62: #{intent_slot_forward.1} parent=59 // pred_check_branch
          %1178 = sbr.rel (%p1176) target = $region64
        $region63: #{intent_slot_forward.1} parent=59 // pred_region
          %s1179 = sand.u32 %s191, 1
          %s1180 = scalar_lea.sflag [#allocation6], %s1179
          %s1181 = sand.u32 %s191, 1
          %s1182 = scalar_lea.vmem [#allocation5], %s1181
          %1183 = dma.done %s1180, 16
        $region64: #{intent_slot_forward.1} parent=59 // pred_fallthru
          _
        // Predicated region
        $region65: #{intent_slot_forward.1} parent=59 // pred_check
          %p1184 = pneg %p232
        $region66: #{intent_slot_forward.1} parent=59 // pred_check_branch
          %1186 = sbr.rel (%p1184) target = $region68
        $region67: #{intent_slot_forward.1} parent=59 // pred_region
          %p1187 = scmp.lt.s32.totalorder %s31, 1
          %s1188 = scalar_select %p1187, %s31, 1
          %s1189 = smul.addr %s1188, 8
          %s1190 = scalar_lea.vmem %s9, %s1189
        $region68: #{intent_slot_forward.1} parent=59 // pred_fallthru
          _
      $region60: #{intent_slot_forward.1} parent=5 // pred_fallthru
        _
    $region6: #{intent_slot_forward.1} parent=1 // loop_footer
      %s29 = sadd.s32 1, %s25
    $region7: #{intent_slot_forward.1} parent=1 // loop_footer_branch
      %24 = sbr.rel target = $region3
    $region8: #{intent_slot_forward.1} parent=1 // loop_exit
      _
    %1191 = vsyncpa [#allocation6], 1
    %s1192 = scalar_lea.sflag [#allocation6], 1
    %1193 = vsyncpa %s1192, 1

</llo_original>
